<compile_context>
chip_gen: v5e
topology: v5e:2x2
jax: 0.10.0
libtpu: 0.0.40
codegen_flags: <defaults>
</compile_context>

<pallas_src>
import jax
import jax.numpy as jnp
from jax.experimental import pallas as pl
from jax.experimental.pallas import tpu as pltpu

NEG_SLOPE = 0.1
BN_EPS = 1e-5
LANE = 128

_VMEM_BUDGET = 28 * 1024 * 1024   # tile-selection budget (conservative for v7x's 64 MiB VMEM)
_VMEM_LIMIT = 48 * 1024 * 1024    # explicit scoped-VMEM limit handed to Mosaic


def _round_up(x, m):
    return (x + m - 1) // m * m


def _vmem_estimate(TH, W, Cpad, Cmid_pad, x_bytes):
    rows = TH + 2
    xbuf = 2 * rows * W * Cpad * x_bytes                                  # manual x double buffer
    outb = 2 * TH * W * Cpad * 4                                          # pipelined output block
    wgts = 2 * ((Cpad + 9 * Cpad) * Cmid_pad * 2 + 2 * (Cmid_pad + Cpad) * 4)
    temps = rows * W * (Cpad * (4 + 2) + Cmid_pad * (4 + 2 + 6)) + TH * W * Cpad * 8
    return xbuf + outb + wgts + temps


def _pick_row_tile(H, W, Cpad, Cmid_pad, x_bytes):
    # Largest row tile that divides H and fits the VMEM budget.
    # TODO(synk): ragged H (pl.cdiv grid + masked last tile) is not implemented, so TH must
    #             divide H; awkward prime H therefore falls back to small tiles.
    for t in range(min(H, 256), 0, -1):
        if H % t == 0 and _vmem_estimate(t, W, Cpad, Cmid_pad, x_bytes) <= _VMEM_BUDGET:
            return t
    return 1


# ---------------------------------------------------------------------------
# Fused kernel: conv1x1 + BN + LReLU -> conv3x3(pad=1) + BN + LReLU -> + skip
# ---------------------------------------------------------------------------
def _fused_residual_kernel(x_hbm, w1_ref, s1_ref, b1_ref, w3_ref, s2_ref, b2_ref,
                           o_ref, xbuf, sem):
    # x_hbm : (N, H, W, Cpad)        HBM ref (no H padding), manual DMA
    # w1_ref: (Cpad, Cmid_pad) bf16          s1/b1: (1, Cmid_pad) f32
    # w3_ref: (3, 3*Cmid_pad, Cpad) bf16     (rows inside a ky group ordered (kx, cin))
    # s2/b2 : (1, Cpad) f32
    # o_ref : (1, TH, W, Cpad)
    # xbuf  : (2, TH+2, W, Cpad)     VMEM double buffer: row 0 = top halo, 1..TH = body,
    #                                TH+1 = bottom halo
    # sem   : DMA semaphores, (2 slots, 3 copies: body / top halo / bottom halo)
    n = pl.program_id(0)
    h = pl.program_id(1)
    nH = pl.num_programs(1)

    TH = o_ref.shape[1]
    W = o_ref.shape[2]
    Cpad = o_ref.shape[3]
    Cmid_pad = w1_ref.shape[1]

    def fetch(h_idx, slot, do):
        # body rows h_idx*TH .. h_idx*TH+TH-1  ->  xbuf rows 1..TH  (always valid)
        do(pltpu.make_async_copy(x_hbm.at[n, pl.ds(h_idx * TH, TH)],
                                 xbuf.at[slot, pl.ds(1, TH)], sem.at[slot, 0]))

        @pl.when(h_idx > 0)                      # top halo row exists inside the image
        def _():
            do(pltpu.make_async_copy(x_hbm.at[n, pl.ds(h_idx * TH - 1, 1)],
                                     xbuf.at[slot, pl.ds(0, 1)], sem.at[slot, 1]))

        @pl.when(h_idx < nH - 1)                 # bottom halo row exists inside the image
        def _():
            do(pltpu.make_async_copy(x_hbm.at[n, pl.ds((h_idx + 1) * TH, 1)],
                                     xbuf.at[slot, pl.ds(TH + 1, 1)], sem.at[slot, 2]))

    start = lambda cp: cp.start()
    wait = lambda cp: cp.wait()
    slot = h % 2

    @pl.when(h == 0)                             # prime the pipeline for this image
    def _():
        fetch(h, slot, start)
    # TODO(synk): cross-image prefetch (start (n+1, h=0) at h == nH-1) would hide this exposed
    #             first-tile DMA, but is unsafe if the parallel N axis is split across
    #             TensorCores (the second core's first tile would wait on a DMA its core never
    #             started), so per-image priming is kept.

    @pl.when(h + 1 < nH)                         # prefetch the next row tile of this image
    def _():
        fetch(h + 1, 1 - slot, start)

    fetch(h, slot, wait)                         # wait for this tile's rows

    xb = xbuf[slot]                              # (TH+2, W, Cpad), x dtype

    # ---- 1x1 conv + BN + LeakyReLU (pointwise; halo rows computed too, then zeroed) ----
    z = jnp.dot(xb.astype(jnp.bfloat16).reshape((TH + 2) * W, Cpad), w1_ref[...],
                preferred_element_type=jnp.float32)              # ((TH+2)*W, Cmid_pad)
    z = z * s1_ref[...] + b1_ref[...]
    y1 = jnp.where(z > 0, z, NEG_SLOPE * z).reshape(TH + 2, W, Cmid_pad)

    # rows outside the image must be exactly zero: the 3x3 conv's padding=1 pads y1, not x
    y1 = jnp.concatenate([
        jnp.where(h > 0, y1[0:1], 0.0),
        y1[1:TH + 1],
        jnp.where(h < nH - 1, y1[TH + 1:TH + 2], 0.0),
    ], axis=0)

    # ---- 3x3 conv as 3 accumulating matmuls grouped by kernel row (K = 3*Cmid_pad) ----
    y1b = y1.astype(jnp.bfloat16)
    zcol = jnp.zeros((TH + 2, 1, Cmid_pad), jnp.bfloat16)
    lft = jnp.concatenate([zcol, y1b[:, :W - 1, :]], axis=1)     # col c holds y1[:, c-1]
    rgt = jnp.concatenate([y1b[:, 1:, :], zcol], axis=1)         # col c holds y1[:, c+1]
    # TODO(synk): pltpu.roll(+edge mask) would build these shifts on the XLU instead of
    #             sublane-offset copies; on v5e, per-tap K=128 matmuls (skipping ycat) suffice.
    ycat = jnp.concatenate([lft, y1b, rgt], axis=-1)             # (TH+2, W, 3*Cmid_pad)

    acc = jnp.zeros((TH * W, Cpad), jnp.float32)
    for ky in range(3):
        acc = acc + jnp.dot(ycat[ky:ky + TH].reshape(TH * W, 3 * Cmid_pad), w3_ref[ky],
                            preferred_element_type=jnp.float32)

    y2 = acc * s2_ref[...] + b2_ref[...]
    y2 = jnp.where(y2 > 0, y2, NEG_SLOPE * y2)

    # residual add: this tile's own rows are xbuf rows 1..TH (x read from HBM exactly once)
    res = xb[1:TH + 1].astype(jnp.float32).reshape(TH * W, Cpad)
    o_ref[...] = (res + y2).reshape(1, TH, W, Cpad).astype(o_ref.dtype)


# ---------------------------------------------------------------------------
# Full ResidualLayer forward (NCHW in / NCHW out, like PyTorch)
# ---------------------------------------------------------------------------
def residual_layer_forward(x_nchw, params, row_tile=None):
    w1, s1, b1, w3, s2, b2 = params          # w1: (Cmid, C, 1, 1), w3: (C, Cmid, 3, 3), BN folded
    N, C, H, W = x_nchw.shape
    Cmid = w1.shape[0]
    Cpad = _round_up(C, LANE)
    Cmid_pad = _round_up(Cmid, LANE)
    x_bytes = jnp.dtype(x_nchw.dtype).itemsize

    if row_tile is None or H % row_tile != 0:
        row_tile = _pick_row_tile(H, W, Cpad, Cmid_pad, x_bytes)
    TH = row_tile
    nH = H // TH

    # NCHW -> NHWC, channels zero-padded to a lane-dense multiple of 128.  No H padding: the
    # kernel fetches halo rows with conditional DMAs and zero-fills the out-of-image rows.
    # TODO(synk): drop the NCHW<->NHWC transposes (and the C pad when C % 128 == 0) entirely
    #             if the surrounding model stays NHWC with lane-aligned channels.
    x_nhwc = jnp.transpose(x_nchw, (0, 2, 3, 1))
    if Cpad != C:
        x_nhwc = jnp.pad(x_nhwc, ((0, 0), (0, 0), (0, 0), (0, Cpad - C)))

    # 1x1 conv weight (OIHW) -> (Cin, Cmid) bf16; folded BN scale/shift zero-padded (f32).
    w1_mat = jnp.pad(jnp.transpose(w1[:, :, 0, 0], (1, 0)),
                     ((0, Cpad - C), (0, Cmid_pad - Cmid))).astype(jnp.bfloat16)
    s1p = jnp.pad(s1, (0, Cmid_pad - Cmid)).reshape(1, Cmid_pad)
    b1p = jnp.pad(b1, (0, Cmid_pad - Cmid)).reshape(1, Cmid_pad)

    # 3x3 conv weight (OIHW) -> (ky, kx, Cmid, Cout) -> (3, 3*Cmid_pad, Cpad) bf16
    # (row index within a ky group is kx*Cmid_pad + cin, matching the kernel's ycat layout).
    w3_mat = jnp.pad(jnp.transpose(w3, (2, 3, 1, 0)),
                     ((0, 0), (0, 0), (0, Cmid_pad - Cmid), (0, Cpad - C)))
    w3_mat = w3_mat.reshape(3, 3 * Cmid_pad, Cpad).astype(jnp.bfloat16)
    s2p = jnp.pad(s2, (0, Cpad - C)).reshape(1, Cpad)
    b2p = jnp.pad(b2, (0, Cpad - C)).reshape(1, Cpad)

    out_nhwc = pl.pallas_call(
        _fused_residual_kernel,
        out_shape=jax.ShapeDtypeStruct((N, H, W, Cpad), x_nchw.dtype),
        grid_spec=pltpu.PrefetchScalarGridSpec(
            num_scalar_prefetch=0,
            grid=(N, nH),
            in_specs=[
                pl.BlockSpec(memory_space=pl.ANY),                             # x (HBM, manual DMA)
                pl.BlockSpec((Cpad, Cmid_pad), lambda n, h: (0, 0)),           # w1 (bf16)
                pl.BlockSpec((1, Cmid_pad), lambda n, h: (0, 0)),              # s1
                pl.BlockSpec((1, Cmid_pad), lambda n, h: (0, 0)),              # b1
                pl.BlockSpec((3, 3 * Cmid_pad, Cpad), lambda n, h: (0, 0, 0)), # w3 (bf16)
                pl.BlockSpec((1, Cpad), lambda n, h: (0, 0)),                  # s2
                pl.BlockSpec((1, Cpad), lambda n, h: (0, 0)),                  # b2
            ],
            # TODO(synk): pipeline_mode=pl.Buffered(1) on the constant weight specs would drop
            #             their redundant second pipeline buffer (a few MiB at C=256).
            out_specs=pl.BlockSpec((1, TH, W, Cpad), lambda n, h: (n, h, 0, 0)),
            scratch_shapes=[
                pltpu.VMEM((2, TH + 2, W, Cpad), x_nchw.dtype),                # x halo double buffer
                pltpu.SemaphoreType.DMA((2, 3)),                               # body/top/bottom sems
            ],
        ),
        compiler_params=pltpu.CompilerParams(
            dimension_semantics=("parallel", "arbitrary"),
            # TODO(synk): on v7x (2 TensorCores) split H into an outer parallel axis when N == 1
            #             so both cores are fed.
            vmem_limit_bytes=_VMEM_LIMIT,
        ),
    )(x_nhwc, w1_mat, s1p, b1p, w3_mat, s2p, b2p)

    # drop channel padding, NHWC -> NCHW
    return jnp.transpose(out_nhwc[..., :C], (0, 3, 1, 2))


# ---------------------------------------------------------------------------
# Pure-JAX reference (same math, NCHW) for a correctness check
# ---------------------------------------------------------------------------
def _ref_forward(x, w1, s1, b1, w3, s2, b2):
    dn = ("NCHW", "OIHW", "NCHW")
    y = jax.lax.conv_general_dilated(x, w1, (1, 1), "VALID", dimension_numbers=dn)
    y = y * s1[None, :, None, None] + b1[None, :, None, None]
    y = jnp.where(y > 0, y, NEG_SLOPE * y)
    y = jax.lax.conv_general_dilated(y, w3, (1, 1), ((1, 1), (1, 1)), dimension_numbers=dn)
    y = y * s2[None, :, None, None] + b2[None, :, None, None]
    y = jnp.where(y > 0, y, NEG_SLOPE * y)
    return x + y


def _fold_bn(gamma, beta, mean, var):
    scale = gamma / jnp.sqrt(var + BN_EPS)
    shift = beta - mean * scale
    return scale, shift


if __name__ == "__main__":
    key = jax.random.PRNGKey(0)
    N, C, H, W = 2, 8, 16, 16
    Cmid = C // 2

    ks = jax.random.split(key, 10)
    x = jax.random.normal(ks[0], (N, C, H, W), jnp.float32)

    # Conv weights (PyTorch OIHW convention), deterministic init.
    w1 = jax.random.normal(ks[1], (Cmid, C, 1, 1), jnp.float32) * 0.2
    w3 = jax.random.normal(ks[2], (C, Cmid, 3, 3), jnp.float32) * 0.1

    # BatchNorm params + running stats, folded to scale/shift (eval mode).
    g1 = jax.random.uniform(ks[3], (Cmid,), jnp.float32, 0.5, 1.5)
    be1 = jax.random.normal(ks[4], (Cmid,), jnp.float32) * 0.1
    m1 = jax.random.normal(ks[5], (Cmid,), jnp.float32) * 0.1
    v1 = jax.random.uniform(ks[6], (Cmid,), jnp.float32, 0.5, 1.5)
    g2 = jax.random.uniform(ks[7], (C,), jnp.float32, 0.5, 1.5)
    be2 = jax.random.normal(ks[8], (C,), jnp.float32) * 0.1
    m2 = jax.random.normal(ks[9], (C,), jnp.float32) * 0.1
    v2 = jax.random.uniform(jax.random.PRNGKey(1), (C,), jnp.float32, 0.5, 1.5)

    s1, b1 = _fold_bn(g1, be1, m1, v1)
    s2, b2 = _fold_bn(g2, be2, m2, v2)
    params = (w1, s1, b1, w3, s2, b2)

    ref = _ref_forward(x, w1, s1, b1, w3, s2, b2)

    # row_tile=8 -> grid (2, 2): exercises the halo DMAs / double buffering / prefetch path.
    # bf16 MXU inputs (f32 accumulation) -> loosened tolerance vs the f32 reference.
    out = jax.block_until_ready(residual_layer_forward(x, params, row_tile=8))
    assert out.shape == (N, C, H, W)
    assert jnp.allclose(out, ref, rtol=2e-2, atol=5e-2), "tiled kernel mismatch vs reference"

    # auto tile (TH = H -> one tile per image): exercises the nH == 1 / no-halo path.
    out2 = jax.block_until_ready(residual_layer_forward(x, params))
    assert jnp.allclose(out2, ref, rtol=2e-2, atol=5e-2), "auto-tile kernel mismatch vs reference"

    print("KERNEL_OK")
</pallas_src>

<mosaic_0001>
module attributes {stable_mosaic.version = 11 : i64} {
  func.func @_fused_residual_kernel(%arg0: i32, %arg1: i32, %arg2: memref<2x16x16x128xf32, #tpu.memory_space<any>>, %arg3: memref<128x128xbf16, #tpu.memory_space<vmem>>, %arg4: memref<1x128xf32, #tpu.memory_space<vmem>>, %arg5: memref<1x128xf32, #tpu.memory_space<vmem>>, %arg6: memref<3x384x128xbf16, #tpu.memory_space<vmem>>, %arg7: memref<1x128xf32, #tpu.memory_space<vmem>>, %arg8: memref<1x128xf32, #tpu.memory_space<vmem>>, %arg9: memref<1x8x16x128xf32, #tpu.memory_space<vmem>>, %arg10: memref<2x10x16x128xf32, #tpu.memory_space<vmem>>, %arg11: memref<2x3x!tpu.dma_semaphore, #tpu.memory_space<semaphore_mem>>) attributes {dimension_semantics = [#tpu.dimension_semantics<parallel>, #tpu.dimension_semantics<arbitrary>], iteration_bounds = array<i64: 2, 2>, scalar_prefetch = 0 : i64, scratch_operands = 2 : i64, tpu.core_type = #tpu.core_type<tc>, window_params = [{}, {pipeline_mode = #tpu.pipeline_mode<synchronous>, transform_indices = @transform_1, window_bounds = array<i64: 128, 128>}, {pipeline_mode = #tpu.pipeline_mode<synchronous>, transform_indices = @transform_2, window_bounds = array<i64: 1, 128>}, {pipeline_mode = #tpu.pipeline_mode<synchronous>, transform_indices = @transform_3, window_bounds = array<i64: 1, 128>}, {pipeline_mode = #tpu.pipeline_mode<synchronous>, transform_indices = @transform_4, window_bounds = array<i64: 3, 384, 128>}, {pipeline_mode = #tpu.pipeline_mode<synchronous>, transform_indices = @transform_5, window_bounds = array<i64: 1, 128>}, {pipeline_mode = #tpu.pipeline_mode<synchronous>, transform_indices = @transform_6, window_bounds = array<i64: 1, 128>}, {transform_indices = @transform_7, window_bounds = array<i64: 1, 8, 16, 128>}]} {
    %c2_i32 = arith.constant 2 : i32
    %c0_i32 = arith.constant 0 : i32
    %0 = arith.cmpi eq, %c2_i32, %c0_i32 : i32
    %c1_i32 = arith.constant 1 : i32
    %1 = arith.select %0, %c1_i32, %c2_i32 : i32
    %2 = arith.remsi %arg1, %1 : i32
    %c0_i32_0 = arith.constant 0 : i32
    %3 = arith.cmpi ne, %2, %c0_i32_0 : i32
    %c0_i32_1 = arith.constant 0 : i32
    %4 = arith.cmpi slt, %2, %c0_i32_1 : i32
    %c0_i32_2 = arith.constant 0 : i32
    %5 = arith.cmpi slt, %1, %c0_i32_2 : i32
    %6 = arith.xori %4, %5 : i1
    %7 = arith.andi %6, %3 : i1
    %8 = arith.addi %2, %1 : i32
    %9 = arith.select %7, %8, %2 : i32
    %c0_i32_3 = arith.constant 0 : i32
    %10 = arith.cmpi eq, %arg1, %c0_i32_3 : i32
    %11 = arith.extui %10 : i1 to i32
    %c0_i32_4 = arith.constant 0 : i32
    %12 = arith.cmpi ne, %11, %c0_i32_4 : i32
    scf.if %12 {
      %c8_i32_54 = arith.constant 8 : i32
      %101 = arith.muli %arg1, %c8_i32_54 : i32
      %c0_i32_55 = arith.constant 0 : i32
      %c0_i32_56 = arith.constant 0 : i32
      %c0_i32_57 = arith.constant 0 : i32
      %102 = tpu.memref_slice %arg2[%arg0, %101, %c0_i32_56, %c0_i32_57] : memref<2x16x16x128xf32, #tpu.memory_space<any>> -> memref<1x8x16x128xf32, #tpu.memory_space<any>>
      %103 = tpu.memref_squeeze %102 : memref<1x8x16x128xf32, #tpu.memory_space<any>> -> memref<8x16x128xf32, #tpu.memory_space<any>>
      %c1_i32_58 = arith.constant 1 : i32
      %c0_i32_59 = arith.constant 0 : i32
      %c0_i32_60 = arith.constant 0 : i32
      %104 = tpu.memref_slice %arg10[%9, %c1_i32_58, %c0_i32_59, %c0_i32_60] : memref<2x10x16x128xf32, #tpu.memory_space<vmem>> -> memref<1x8x16x128xf32, #tpu.memory_space<vmem>>
      %105 = tpu.memref_squeeze %104 : memref<1x8x16x128xf32, #tpu.memory_space<vmem>> -> memref<8x16x128xf32, #tpu.memory_space<vmem>>
      %106 = tpu.memref_slice %arg11[%9, %c0_i32_55] : memref<2x3x!tpu.dma_semaphore, #tpu.memory_space<semaphore_mem>> -> memref<1x1x!tpu.dma_semaphore, #tpu.memory_space<semaphore_mem>>
      %107 = tpu.memref_squeeze %106 : memref<1x1x!tpu.dma_semaphore, #tpu.memory_space<semaphore_mem>> -> memref<!tpu.dma_semaphore, #tpu.memory_space<semaphore_mem>>
      tpu.enqueue_dma source(%103 : memref<8x16x128xf32, #tpu.memory_space<any>>) target(%105 : memref<8x16x128xf32, #tpu.memory_space<vmem>>) target_semaphore(%107 : memref<!tpu.dma_semaphore, #tpu.memory_space<semaphore_mem>>)
      %c0_i32_61 = arith.constant 0 : i32
      %108 = arith.cmpi sgt, %arg1, %c0_i32_61 : i32
      %109 = arith.extui %108 : i1 to i32
      %c0_i32_62 = arith.constant 0 : i32
      %110 = arith.cmpi ne, %109, %c0_i32_62 : i32
      scf.if %110 {
        %c8_i32_65 = arith.constant 8 : i32
        %114 = arith.muli %arg1, %c8_i32_65 : i32
        %c1_i32_66 = arith.constant 1 : i32
        %115 = arith.subi %114, %c1_i32_66 : i32
        %c1_i32_67 = arith.constant 1 : i32
        %c0_i32_68 = arith.constant 0 : i32
        %c0_i32_69 = arith.constant 0 : i32
        %116 = tpu.memref_slice %arg2[%arg0, %115, %c0_i32_68, %c0_i32_69] : memref<2x16x16x128xf32, #tpu.memory_space<any>> -> memref<1x1x16x128xf32, #tpu.memory_space<any>>
        %117 = tpu.memref_squeeze %116 : memref<1x1x16x128xf32, #tpu.memory_space<any>> -> memref<1x16x128xf32, #tpu.memory_space<any>>
        %c0_i32_70 = arith.constant 0 : i32
        %c0_i32_71 = arith.constant 0 : i32
        %c0_i32_72 = arith.constant 0 : i32
        %118 = tpu.memref_slice %arg10[%9, %c0_i32_70, %c0_i32_71, %c0_i32_72] : memref<2x10x16x128xf32, #tpu.memory_space<vmem>> -> memref<1x1x16x128xf32, #tpu.memory_space<vmem>>
        %119 = tpu.memref_squeeze %118 : memref<1x1x16x128xf32, #tpu.memory_space<vmem>> -> memref<1x16x128xf32, #tpu.memory_space<vmem>>
        %120 = tpu.memref_slice %arg11[%9, %c1_i32_67] : memref<2x3x!tpu.dma_semaphore, #tpu.memory_space<semaphore_mem>> -> memref<1x1x!tpu.dma_semaphore, #tpu.memory_space<semaphore_mem>>
        %121 = tpu.memref_squeeze %120 : memref<1x1x!tpu.dma_semaphore, #tpu.memory_space<semaphore_mem>> -> memref<!tpu.dma_semaphore, #tpu.memory_space<semaphore_mem>>
        tpu.enqueue_dma source(%117 : memref<1x16x128xf32, #tpu.memory_space<any>>) target(%119 : memref<1x16x128xf32, #tpu.memory_space<vmem>>) target_semaphore(%121 : memref<!tpu.dma_semaphore, #tpu.memory_space<semaphore_mem>>)
      } else {
      }
      %c1_i32_63 = arith.constant 1 : i32
      %111 = arith.cmpi slt, %arg1, %c1_i32_63 : i32
      %112 = arith.extui %111 : i1 to i32
      %c0_i32_64 = arith.constant 0 : i32
      %113 = arith.cmpi ne, %112, %c0_i32_64 : i32
      scf.if %113 {
        %c1_i32_65 = arith.constant 1 : i32
        %114 = arith.addi %arg1, %c1_i32_65 : i32
        %c8_i32_66 = arith.constant 8 : i32
        %115 = arith.muli %114, %c8_i32_66 : i32
        %c2_i32_67 = arith.constant 2 : i32
        %c0_i32_68 = arith.constant 0 : i32
        %c0_i32_69 = arith.constant 0 : i32
        %116 = tpu.memref_slice %arg2[%arg0, %115, %c0_i32_68, %c0_i32_69] : memref<2x16x16x128xf32, #tpu.memory_space<any>> -> memref<1x1x16x128xf32, #tpu.memory_space<any>>
        %117 = tpu.memref_squeeze %116 : memref<1x1x16x128xf32, #tpu.memory_space<any>> -> memref<1x16x128xf32, #tpu.memory_space<any>>
        %c9_i32 = arith.constant 9 : i32
        %c0_i32_70 = arith.constant 0 : i32
        %c0_i32_71 = arith.constant 0 : i32
        %118 = tpu.memref_slice %arg10[%9, %c9_i32, %c0_i32_70, %c0_i32_71] : memref<2x10x16x128xf32, #tpu.memory_space<vmem>> -> memref<1x1x16x128xf32, #tpu.memory_space<vmem>>
        %119 = tpu.memref_squeeze %118 : memref<1x1x16x128xf32, #tpu.memory_space<vmem>> -> memref<1x16x128xf32, #tpu.memory_space<vmem>>
        %120 = tpu.memref_slice %arg11[%9, %c2_i32_67] : memref<2x3x!tpu.dma_semaphore, #tpu.memory_space<semaphore_mem>> -> memref<1x1x!tpu.dma_semaphore, #tpu.memory_space<semaphore_mem>>
        %121 = tpu.memref_squeeze %120 : memref<1x1x!tpu.dma_semaphore, #tpu.memory_space<semaphore_mem>> -> memref<!tpu.dma_semaphore, #tpu.memory_space<semaphore_mem>>
        tpu.enqueue_dma source(%117 : memref<1x16x128xf32, #tpu.memory_space<any>>) target(%119 : memref<1x16x128xf32, #tpu.memory_space<vmem>>) target_semaphore(%121 : memref<!tpu.dma_semaphore, #tpu.memory_space<semaphore_mem>>)
      } else {
      }
    } else {
    }
    %c1_i32_5 = arith.constant 1 : i32
    %13 = arith.addi %arg1, %c1_i32_5 : i32
    %c2_i32_6 = arith.constant 2 : i32
    %14 = arith.cmpi slt, %13, %c2_i32_6 : i32
    %15 = arith.extui %14 : i1 to i32
    %c0_i32_7 = arith.constant 0 : i32
    %16 = arith.cmpi ne, %15, %c0_i32_7 : i32
    scf.if %16 {
      %c1_i32_54 = arith.constant 1 : i32
      %101 = arith.addi %arg1, %c1_i32_54 : i32
      %c1_i32_55 = arith.constant 1 : i32
      %102 = arith.subi %c1_i32_55, %9 : i32
      %c8_i32_56 = arith.constant 8 : i32
      %103 = arith.muli %101, %c8_i32_56 : i32
      %c0_i32_57 = arith.constant 0 : i32
      %c0_i32_58 = arith.constant 0 : i32
      %c0_i32_59 = arith.constant 0 : i32
      %104 = tpu.memref_slice %arg2[%arg0, %103, %c0_i32_58, %c0_i32_59] : memref<2x16x16x128xf32, #tpu.memory_space<any>> -> memref<1x8x16x128xf32, #tpu.memory_space<any>>
      %105 = tpu.memref_squeeze %104 : memref<1x8x16x128xf32, #tpu.memory_space<any>> -> memref<8x16x128xf32, #tpu.memory_space<any>>
      %c1_i32_60 = arith.constant 1 : i32
      %c0_i32_61 = arith.constant 0 : i32
      %c0_i32_62 = arith.constant 0 : i32
      %106 = tpu.memref_slice %arg10[%102, %c1_i32_60, %c0_i32_61, %c0_i32_62] : memref<2x10x16x128xf32, #tpu.memory_space<vmem>> -> memref<1x8x16x128xf32, #tpu.memory_space<vmem>>
      %107 = tpu.memref_squeeze %106 : memref<1x8x16x128xf32, #tpu.memory_space<vmem>> -> memref<8x16x128xf32, #tpu.memory_space<vmem>>
      %108 = tpu.memref_slice %arg11[%102, %c0_i32_57] : memref<2x3x!tpu.dma_semaphore, #tpu.memory_space<semaphore_mem>> -> memref<1x1x!tpu.dma_semaphore, #tpu.memory_space<semaphore_mem>>
      %109 = tpu.memref_squeeze %108 : memref<1x1x!tpu.dma_semaphore, #tpu.memory_space<semaphore_mem>> -> memref<!tpu.dma_semaphore, #tpu.memory_space<semaphore_mem>>
      tpu.enqueue_dma source(%105 : memref<8x16x128xf32, #tpu.memory_space<any>>) target(%107 : memref<8x16x128xf32, #tpu.memory_space<vmem>>) target_semaphore(%109 : memref<!tpu.dma_semaphore, #tpu.memory_space<semaphore_mem>>)
      %c0_i32_63 = arith.constant 0 : i32
      %110 = arith.cmpi sgt, %101, %c0_i32_63 : i32
      %111 = arith.extui %110 : i1 to i32
      %c0_i32_64 = arith.constant 0 : i32
      %112 = arith.cmpi ne, %111, %c0_i32_64 : i32
      scf.if %112 {
        %c8_i32_67 = arith.constant 8 : i32
        %116 = arith.muli %101, %c8_i32_67 : i32
        %c1_i32_68 = arith.constant 1 : i32
        %117 = arith.subi %116, %c1_i32_68 : i32
        %c1_i32_69 = arith.constant 1 : i32
        %c0_i32_70 = arith.constant 0 : i32
        %c0_i32_71 = arith.constant 0 : i32
        %118 = tpu.memref_slice %arg2[%arg0, %117, %c0_i32_70, %c0_i32_71] : memref<2x16x16x128xf32, #tpu.memory_space<any>> -> memref<1x1x16x128xf32, #tpu.memory_space<any>>
        %119 = tpu.memref_squeeze %118 : memref<1x1x16x128xf32, #tpu.memory_space<any>> -> memref<1x16x128xf32, #tpu.memory_space<any>>
        %c0_i32_72 = arith.constant 0 : i32
        %c0_i32_73 = arith.constant 0 : i32
        %c0_i32_74 = arith.constant 0 : i32
        %120 = tpu.memref_slice %arg10[%102, %c0_i32_72, %c0_i32_73, %c0_i32_74] : memref<2x10x16x128xf32, #tpu.memory_space<vmem>> -> memref<1x1x16x128xf32, #tpu.memory_space<vmem>>
        %121 = tpu.memref_squeeze %120 : memref<1x1x16x128xf32, #tpu.memory_space<vmem>> -> memref<1x16x128xf32, #tpu.memory_space<vmem>>
        %122 = tpu.memref_slice %arg11[%102, %c1_i32_69] : memref<2x3x!tpu.dma_semaphore, #tpu.memory_space<semaphore_mem>> -> memref<1x1x!tpu.dma_semaphore, #tpu.memory_space<semaphore_mem>>
        %123 = tpu.memref_squeeze %122 : memref<1x1x!tpu.dma_semaphore, #tpu.memory_space<semaphore_mem>> -> memref<!tpu.dma_semaphore, #tpu.memory_space<semaphore_mem>>
        tpu.enqueue_dma source(%119 : memref<1x16x128xf32, #tpu.memory_space<any>>) target(%121 : memref<1x16x128xf32, #tpu.memory_space<vmem>>) target_semaphore(%123 : memref<!tpu.dma_semaphore, #tpu.memory_space<semaphore_mem>>)
      } else {
      }
      %c1_i32_65 = arith.constant 1 : i32
      %113 = arith.cmpi slt, %101, %c1_i32_65 : i32
      %114 = arith.extui %113 : i1 to i32
      %c0_i32_66 = arith.constant 0 : i32
      %115 = arith.cmpi ne, %114, %c0_i32_66 : i32
      scf.if %115 {
        %c1_i32_67 = arith.constant 1 : i32
        %116 = arith.addi %101, %c1_i32_67 : i32
        %c8_i32_68 = arith.constant 8 : i32
        %117 = arith.muli %116, %c8_i32_68 : i32
        %c2_i32_69 = arith.constant 2 : i32
        %c0_i32_70 = arith.constant 0 : i32
        %c0_i32_71 = arith.constant 0 : i32
        %118 = tpu.memref_slice %arg2[%arg0, %117, %c0_i32_70, %c0_i32_71] : memref<2x16x16x128xf32, #tpu.memory_space<any>> -> memref<1x1x16x128xf32, #tpu.memory_space<any>>
        %119 = tpu.memref_squeeze %118 : memref<1x1x16x128xf32, #tpu.memory_space<any>> -> memref<1x16x128xf32, #tpu.memory_space<any>>
        %c9_i32 = arith.constant 9 : i32
        %c0_i32_72 = arith.constant 0 : i32
        %c0_i32_73 = arith.constant 0 : i32
        %120 = tpu.memref_slice %arg10[%102, %c9_i32, %c0_i32_72, %c0_i32_73] : memref<2x10x16x128xf32, #tpu.memory_space<vmem>> -> memref<1x1x16x128xf32, #tpu.memory_space<vmem>>
        %121 = tpu.memref_squeeze %120 : memref<1x1x16x128xf32, #tpu.memory_space<vmem>> -> memref<1x16x128xf32, #tpu.memory_space<vmem>>
        %122 = tpu.memref_slice %arg11[%102, %c2_i32_69] : memref<2x3x!tpu.dma_semaphore, #tpu.memory_space<semaphore_mem>> -> memref<1x1x!tpu.dma_semaphore, #tpu.memory_space<semaphore_mem>>
        %123 = tpu.memref_squeeze %122 : memref<1x1x!tpu.dma_semaphore, #tpu.memory_space<semaphore_mem>> -> memref<!tpu.dma_semaphore, #tpu.memory_space<semaphore_mem>>
        tpu.enqueue_dma source(%119 : memref<1x16x128xf32, #tpu.memory_space<any>>) target(%121 : memref<1x16x128xf32, #tpu.memory_space<vmem>>) target_semaphore(%123 : memref<!tpu.dma_semaphore, #tpu.memory_space<semaphore_mem>>)
      } else {
      }
    } else {
    }
    %c8_i32 = arith.constant 8 : i32
    %17 = arith.muli %arg1, %c8_i32 : i32
    %c0_i32_8 = arith.constant 0 : i32
    %c0_i32_9 = arith.constant 0 : i32
    %c0_i32_10 = arith.constant 0 : i32
    %18 = tpu.memref_slice %arg2[%arg0, %17, %c0_i32_9, %c0_i32_10] : memref<2x16x16x128xf32, #tpu.memory_space<any>> -> memref<1x8x16x128xf32, #tpu.memory_space<any>>
    %19 = tpu.memref_squeeze %18 : memref<1x8x16x128xf32, #tpu.memory_space<any>> -> memref<8x16x128xf32, #tpu.memory_space<any>>
    %c1_i32_11 = arith.constant 1 : i32
    %c0_i32_12 = arith.constant 0 : i32
    %c0_i32_13 = arith.constant 0 : i32
    %20 = tpu.memref_slice %arg10[%9, %c1_i32_11, %c0_i32_12, %c0_i32_13] : memref<2x10x16x128xf32, #tpu.memory_space<vmem>> -> memref<1x8x16x128xf32, #tpu.memory_space<vmem>>
    %21 = tpu.memref_squeeze %20 : memref<1x8x16x128xf32, #tpu.memory_space<vmem>> -> memref<8x16x128xf32, #tpu.memory_space<vmem>>
    %22 = tpu.memref_slice %arg11[%9, %c0_i32_8] : memref<2x3x!tpu.dma_semaphore, #tpu.memory_space<semaphore_mem>> -> memref<1x1x!tpu.dma_semaphore, #tpu.memory_space<semaphore_mem>>
    %23 = tpu.memref_squeeze %22 : memref<1x1x!tpu.dma_semaphore, #tpu.memory_space<semaphore_mem>> -> memref<!tpu.dma_semaphore, #tpu.memory_space<semaphore_mem>>
    tpu.wait_dma2 semaphore(%23 : memref<!tpu.dma_semaphore, #tpu.memory_space<semaphore_mem>>) src(%19 : memref<8x16x128xf32, #tpu.memory_space<any>>) dst(%21 : memref<8x16x128xf32, #tpu.memory_space<vmem>>)
    %c0_i32_14 = arith.constant 0 : i32
    %24 = arith.cmpi sgt, %arg1, %c0_i32_14 : i32
    %25 = arith.extui %24 : i1 to i32
    %c0_i32_15 = arith.constant 0 : i32
    %26 = arith.cmpi ne, %25, %c0_i32_15 : i32
    scf.if %26 {
      %c8_i32_54 = arith.constant 8 : i32
      %101 = arith.muli %arg1, %c8_i32_54 : i32
      %c1_i32_55 = arith.constant 1 : i32
      %102 = arith.subi %101, %c1_i32_55 : i32
      %c1_i32_56 = arith.constant 1 : i32
      %c0_i32_57 = arith.constant 0 : i32
      %c0_i32_58 = arith.constant 0 : i32
      %103 = tpu.memref_slice %arg2[%arg0, %102, %c0_i32_57, %c0_i32_58] : memref<2x16x16x128xf32, #tpu.memory_space<any>> -> memref<1x1x16x128xf32, #tpu.memory_space<any>>
      %104 = tpu.memref_squeeze %103 : memref<1x1x16x128xf32, #tpu.memory_space<any>> -> memref<1x16x128xf32, #tpu.memory_space<any>>
      %c0_i32_59 = arith.constant 0 : i32
      %c0_i32_60 = arith.constant 0 : i32
      %c0_i32_61 = arith.constant 0 : i32
      %105 = tpu.memref_slice %arg10[%9, %c0_i32_59, %c0_i32_60, %c0_i32_61] : memref<2x10x16x128xf32, #tpu.memory_space<vmem>> -> memref<1x1x16x128xf32, #tpu.memory_space<vmem>>
      %106 = tpu.memref_squeeze %105 : memref<1x1x16x128xf32, #tpu.memory_space<vmem>> -> memref<1x16x128xf32, #tpu.memory_space<vmem>>
      %107 = tpu.memref_slice %arg11[%9, %c1_i32_56] : memref<2x3x!tpu.dma_semaphore, #tpu.memory_space<semaphore_mem>> -> memref<1x1x!tpu.dma_semaphore, #tpu.memory_space<semaphore_mem>>
      %108 = tpu.memref_squeeze %107 : memref<1x1x!tpu.dma_semaphore, #tpu.memory_space<semaphore_mem>> -> memref<!tpu.dma_semaphore, #tpu.memory_space<semaphore_mem>>
      tpu.wait_dma2 semaphore(%108 : memref<!tpu.dma_semaphore, #tpu.memory_space<semaphore_mem>>) src(%104 : memref<1x16x128xf32, #tpu.memory_space<any>>) dst(%106 : memref<1x16x128xf32, #tpu.memory_space<vmem>>)
    } else {
    }
    %c1_i32_16 = arith.constant 1 : i32
    %27 = arith.cmpi slt, %arg1, %c1_i32_16 : i32
    %28 = arith.extui %27 : i1 to i32
    %c0_i32_17 = arith.constant 0 : i32
    %29 = arith.cmpi ne, %28, %c0_i32_17 : i32
    scf.if %29 {
      %c1_i32_54 = arith.constant 1 : i32
      %101 = arith.addi %arg1, %c1_i32_54 : i32
      %c8_i32_55 = arith.constant 8 : i32
      %102 = arith.muli %101, %c8_i32_55 : i32
      %c2_i32_56 = arith.constant 2 : i32
      %c0_i32_57 = arith.constant 0 : i32
      %c0_i32_58 = arith.constant 0 : i32
      %103 = tpu.memref_slice %arg2[%arg0, %102, %c0_i32_57, %c0_i32_58] : memref<2x16x16x128xf32, #tpu.memory_space<any>> -> memref<1x1x16x128xf32, #tpu.memory_space<any>>
      %104 = tpu.memref_squeeze %103 : memref<1x1x16x128xf32, #tpu.memory_space<any>> -> memref<1x16x128xf32, #tpu.memory_space<any>>
      %c9_i32 = arith.constant 9 : i32
      %c0_i32_59 = arith.constant 0 : i32
      %c0_i32_60 = arith.constant 0 : i32
      %105 = tpu.memref_slice %arg10[%9, %c9_i32, %c0_i32_59, %c0_i32_60] : memref<2x10x16x128xf32, #tpu.memory_space<vmem>> -> memref<1x1x16x128xf32, #tpu.memory_space<vmem>>
      %106 = tpu.memref_squeeze %105 : memref<1x1x16x128xf32, #tpu.memory_space<vmem>> -> memref<1x16x128xf32, #tpu.memory_space<vmem>>
      %107 = tpu.memref_slice %arg11[%9, %c2_i32_56] : memref<2x3x!tpu.dma_semaphore, #tpu.memory_space<semaphore_mem>> -> memref<1x1x!tpu.dma_semaphore, #tpu.memory_space<semaphore_mem>>
      %108 = tpu.memref_squeeze %107 : memref<1x1x!tpu.dma_semaphore, #tpu.memory_space<semaphore_mem>> -> memref<!tpu.dma_semaphore, #tpu.memory_space<semaphore_mem>>
      tpu.wait_dma2 semaphore(%108 : memref<!tpu.dma_semaphore, #tpu.memory_space<semaphore_mem>>) src(%104 : memref<1x16x128xf32, #tpu.memory_space<any>>) dst(%106 : memref<1x16x128xf32, #tpu.memory_space<vmem>>)
    } else {
    }
    %30 = arith.index_cast %9 : i32 to index
    %c0 = arith.constant 0 : index
    %c0_18 = arith.constant 0 : index
    %c0_19 = arith.constant 0 : index
    %31 = vector.load %arg10[%30, %c0, %c0_18, %c0_19] : memref<2x10x16x128xf32, #tpu.memory_space<vmem>>, vector<1x10x16x128xf32>
    %32 = vector.shape_cast %31 : vector<1x10x16x128xf32> to vector<10x16x128xf32>
    %33 = arith.truncf %32 : vector<10x16x128xf32> to vector<10x16x128xbf16>
    %34 = vector.shape_cast %33 : vector<10x16x128xbf16> to vector<160x128xbf16>
    %c0_20 = arith.constant 0 : index
    %c0_21 = arith.constant 0 : index
    %35 = vector.load %arg3[%c0_20, %c0_21] : memref<128x128xbf16, #tpu.memory_space<vmem>>, vector<128x128xbf16>
    %cst = arith.constant dense<0.000000e+00> : vector<160x128xf32>
    %36 = tpu.matmul %34, %35, %cst {dimension_numbers = #tpu.dot_dimension_numbers<[1], [0], [0], [1], [0, 0, 1, 1], [], []>} : vector<160x128xbf16>, vector<128x128xbf16>, vector<160x128xf32> -> vector<160x128xf32>
    %c0_22 = arith.constant 0 : index
    %c0_23 = arith.constant 0 : index
    %37 = vector.load %arg4[%c0_22, %c0_23] : memref<1x128xf32, #tpu.memory_space<vmem>>, vector<1x128xf32>
    %38 = vector.broadcast %37 : vector<1x128xf32> to vector<160x128xf32>
    %39 = arith.mulf %36, %38 : vector<160x128xf32>
    %c0_24 = arith.constant 0 : index
    %c0_25 = arith.constant 0 : index
    %40 = vector.load %arg5[%c0_24, %c0_25] : memref<1x128xf32, #tpu.memory_space<vmem>>, vector<1x128xf32>
    %41 = vector.broadcast %40 : vector<1x128xf32> to vector<160x128xf32>
    %42 = arith.addf %39, %41 : vector<160x128xf32>
    %cst_26 = arith.constant 0.000000e+00 : f32
    %43 = vector.broadcast %cst_26 : f32 to vector<160x128xf32>
    %44 = arith.cmpf ogt, %42, %43 : vector<160x128xf32>
    %cst_27 = arith.constant 1.000000e-01 : f32
    %45 = vector.broadcast %cst_27 : f32 to vector<160x128xf32>
    %46 = arith.mulf %45, %42 : vector<160x128xf32>
    %47 = arith.select %44, %42, %46 : vector<160x128xi1>, vector<160x128xf32>
    %48 = vector.shape_cast %47 : vector<160x128xf32> to vector<10x16x128xf32>
    %c0_i32_28 = arith.constant 0 : i32
    %49 = arith.cmpi sgt, %arg1, %c0_i32_28 : i32
    %50 = vector.extract_strided_slice %48 {offsets = [0, 0, 0], sizes = [1, 16, 128], strides = [1, 1, 1]} : vector<10x16x128xf32> to vector<1x16x128xf32>
    %cst_29 = arith.constant 0.000000e+00 : f32
    %51 = vector.broadcast %cst_29 : f32 to vector<1x16x128xf32>
    %52 = arith.select %49, %50, %51 : vector<1x16x128xf32>
    %53 = vector.extract_strided_slice %48 {offsets = [1, 0, 0], sizes = [8, 16, 128], strides = [1, 1, 1]} : vector<10x16x128xf32> to vector<8x16x128xf32>
    %c1_i32_30 = arith.constant 1 : i32
    %54 = arith.cmpi slt, %arg1, %c1_i32_30 : i32
    %55 = vector.extract_strided_slice %48 {offsets = [9, 0, 0], sizes = [1, 16, 128], strides = [1, 1, 1]} : vector<10x16x128xf32> to vector<1x16x128xf32>
    %cst_31 = arith.constant 0.000000e+00 : f32
    %56 = vector.broadcast %cst_31 : f32 to vector<1x16x128xf32>
    %57 = arith.select %54, %55, %56 : vector<1x16x128xf32>
    %58 = tpu.concatenate %52, %53, %57 in 0 : vector<1x16x128xf32>, vector<8x16x128xf32>, vector<1x16x128xf32> -> vector<10x16x128xf32>
    %59 = arith.truncf %58 : vector<10x16x128xf32> to vector<10x16x128xbf16>
    %cst_32 = arith.constant 0.000000e+00 : bf16
    %60 = vector.broadcast %cst_32 : bf16 to vector<10x1x128xbf16>
    %61 = vector.extract_strided_slice %59 {offsets = [0, 0, 0], sizes = [10, 15, 128], strides = [1, 1, 1]} : vector<10x16x128xbf16> to vector<10x15x128xbf16>
    %62 = tpu.concatenate %60, %61 in 1 : vector<10x1x128xbf16>, vector<10x15x128xbf16> -> vector<10x16x128xbf16>
    %63 = vector.extract_strided_slice %59 {offsets = [0, 1, 0], sizes = [10, 15, 128], strides = [1, 1, 1]} : vector<10x16x128xbf16> to vector<10x15x128xbf16>
    %64 = tpu.concatenate %63, %60 in 1 : vector<10x15x128xbf16>, vector<10x1x128xbf16> -> vector<10x16x128xbf16>
    %65 = tpu.concatenate %62, %59, %64 in 2 : vector<10x16x128xbf16>, vector<10x16x128xbf16>, vector<10x16x128xbf16> -> vector<10x16x384xbf16>
    %cst_33 = arith.constant 0.000000e+00 : f32
    %66 = vector.broadcast %cst_33 : f32 to vector<128x128xf32>
    %67 = vector.extract_strided_slice %65 {offsets = [0, 0, 0], sizes = [8, 16, 384], strides = [1, 1, 1]} : vector<10x16x384xbf16> to vector<8x16x384xbf16>
    %68 = vector.shape_cast %67 : vector<8x16x384xbf16> to vector<128x384xbf16>
    %c0_34 = arith.constant 0 : index
    %c0_35 = arith.constant 0 : index
    %c0_36 = arith.constant 0 : index
    %69 = vector.load %arg6[%c0_34, %c0_35, %c0_36] : memref<3x384x128xbf16, #tpu.memory_space<vmem>>, vector<1x384x128xbf16>
    %70 = vector.shape_cast %69 : vector<1x384x128xbf16> to vector<384x128xbf16>
    %cst_37 = arith.constant dense<0.000000e+00> : vector<128x128xf32>
    %71 = tpu.matmul %68, %70, %cst_37 {dimension_numbers = #tpu.dot_dimension_numbers<[1], [0], [0], [1], [0, 0, 1, 1], [], []>} : vector<128x384xbf16>, vector<384x128xbf16>, vector<128x128xf32> -> vector<128x128xf32>
    %72 = arith.addf %66, %71 : vector<128x128xf32>
    %73 = vector.extract_strided_slice %65 {offsets = [1, 0, 0], sizes = [8, 16, 384], strides = [1, 1, 1]} : vector<10x16x384xbf16> to vector<8x16x384xbf16>
    %74 = vector.shape_cast %73 : vector<8x16x384xbf16> to vector<128x384xbf16>
    %c1 = arith.constant 1 : index
    %c0_38 = arith.constant 0 : index
    %c0_39 = arith.constant 0 : index
    %75 = vector.load %arg6[%c1, %c0_38, %c0_39] : memref<3x384x128xbf16, #tpu.memory_space<vmem>>, vector<1x384x128xbf16>
    %76 = vector.shape_cast %75 : vector<1x384x128xbf16> to vector<384x128xbf16>
    %cst_40 = arith.constant dense<0.000000e+00> : vector<128x128xf32>
    %77 = tpu.matmul %74, %76, %cst_40 {dimension_numbers = #tpu.dot_dimension_numbers<[1], [0], [0], [1], [0, 0, 1, 1], [], []>} : vector<128x384xbf16>, vector<384x128xbf16>, vector<128x128xf32> -> vector<128x128xf32>
    %78 = arith.addf %72, %77 : vector<128x128xf32>
    %79 = vector.extract_strided_slice %65 {offsets = [2, 0, 0], sizes = [8, 16, 384], strides = [1, 1, 1]} : vector<10x16x384xbf16> to vector<8x16x384xbf16>
    %80 = vector.shape_cast %79 : vector<8x16x384xbf16> to vector<128x384xbf16>
    %c2 = arith.constant 2 : index
    %c0_41 = arith.constant 0 : index
    %c0_42 = arith.constant 0 : index
    %81 = vector.load %arg6[%c2, %c0_41, %c0_42] : memref<3x384x128xbf16, #tpu.memory_space<vmem>>, vector<1x384x128xbf16>
    %82 = vector.shape_cast %81 : vector<1x384x128xbf16> to vector<384x128xbf16>
    %cst_43 = arith.constant dense<0.000000e+00> : vector<128x128xf32>
    %83 = tpu.matmul %80, %82, %cst_43 {dimension_numbers = #tpu.dot_dimension_numbers<[1], [0], [0], [1], [0, 0, 1, 1], [], []>} : vector<128x384xbf16>, vector<384x128xbf16>, vector<128x128xf32> -> vector<128x128xf32>
    %84 = arith.addf %78, %83 : vector<128x128xf32>
    %c0_44 = arith.constant 0 : index
    %c0_45 = arith.constant 0 : index
    %85 = vector.load %arg7[%c0_44, %c0_45] : memref<1x128xf32, #tpu.memory_space<vmem>>, vector<1x128xf32>
    %86 = vector.broadcast %85 : vector<1x128xf32> to vector<128x128xf32>
    %87 = arith.mulf %84, %86 : vector<128x128xf32>
    %c0_46 = arith.constant 0 : index
    %c0_47 = arith.constant 0 : index
    %88 = vector.load %arg8[%c0_46, %c0_47] : memref<1x128xf32, #tpu.memory_space<vmem>>, vector<1x128xf32>
    %89 = vector.broadcast %88 : vector<1x128xf32> to vector<128x128xf32>
    %90 = arith.addf %87, %89 : vector<128x128xf32>
    %cst_48 = arith.constant 0.000000e+00 : f32
    %91 = vector.broadcast %cst_48 : f32 to vector<128x128xf32>
    %92 = arith.cmpf ogt, %90, %91 : vector<128x128xf32>
    %cst_49 = arith.constant 1.000000e-01 : f32
    %93 = vector.broadcast %cst_49 : f32 to vector<128x128xf32>
    %94 = arith.mulf %93, %90 : vector<128x128xf32>
    %95 = arith.select %92, %90, %94 : vector<128x128xi1>, vector<128x128xf32>
    %96 = vector.extract_strided_slice %32 {offsets = [1, 0, 0], sizes = [8, 16, 128], strides = [1, 1, 1]} : vector<10x16x128xf32> to vector<8x16x128xf32>
    %97 = vector.shape_cast %96 : vector<8x16x128xf32> to vector<128x128xf32>
    %98 = arith.addf %97, %95 : vector<128x128xf32>
    %99 = vector.shape_cast %98 : vector<128x128xf32> to vector<1x8x16x128xf32>
    %c0_50 = arith.constant 0 : index
    %c0_51 = arith.constant 0 : index
    %c0_52 = arith.constant 0 : index
    %c0_53 = arith.constant 0 : index
    %100 = vector.load %arg9[%c0_50, %c0_51, %c0_52, %c0_53] : memref<1x8x16x128xf32, #tpu.memory_space<vmem>>, vector<1x8x16x128xf32>
    tpu.vector_store %arg9[%c0_50, %c0_51, %c0_52, %c0_53], %99 {strides = array<i32>} : memref<1x8x16x128xf32, #tpu.memory_space<vmem>>, vector<1x8x16x128xf32>,
    return
  }
  func.func @transform_1(%arg0: i32, %arg1: i32) -> (i32, i32) {
    %c0_i32 = arith.constant 0 : i32
    %c0_i32_0 = arith.constant 0 : i32
    %c0_i32_1 = arith.constant 0 : i32
    return %c0_i32, %c0_i32_0 : i32, i32
  }
  func.func @transform_2(%arg0: i32, %arg1: i32) -> (i32, i32) {
    %c0_i32 = arith.constant 0 : i32
    %c0_i32_0 = arith.constant 0 : i32
    %c0_i32_1 = arith.constant 0 : i32
    return %c0_i32, %c0_i32_0 : i32, i32
  }
  func.func @transform_3(%arg0: i32, %arg1: i32) -> (i32, i32) {
    %c0_i32 = arith.constant 0 : i32
    %c0_i32_0 = arith.constant 0 : i32
    %c0_i32_1 = arith.constant 0 : i32
    return %c0_i32, %c0_i32_0 : i32, i32
  }
  func.func @transform_4(%arg0: i32, %arg1: i32) -> (i32, i32, i32) {
    %c0_i32 = arith.constant 0 : i32
    %c0_i32_0 = arith.constant 0 : i32
    %c0_i32_1 = arith.constant 0 : i32
    %c0_i32_2 = arith.constant 0 : i32
    return %c0_i32, %c0_i32_0, %c0_i32_1 : i32, i32, i32
  }
  func.func @transform_5(%arg0: i32, %arg1: i32) -> (i32, i32) {
    %c0_i32 = arith.constant 0 : i32
    %c0_i32_0 = arith.constant 0 : i32
    %c0_i32_1 = arith.constant 0 : i32
    return %c0_i32, %c0_i32_0 : i32, i32
  }
  func.func @transform_6(%arg0: i32, %arg1: i32) -> (i32, i32) {
    %c0_i32 = arith.constant 0 : i32
    %c0_i32_0 = arith.constant 0 : i32
    %c0_i32_1 = arith.constant 0 : i32
    return %c0_i32, %c0_i32_0 : i32, i32
  }
  func.func @transform_7(%arg0: i32, %arg1: i32) -> (i32, i32, i32, i32) {
    %c0_i32 = arith.constant 0 : i32
    %c0_i32_0 = arith.constant 0 : i32
    %c0_i32_1 = arith.constant 0 : i32
    return %arg0, %arg1, %c0_i32, %c0_i32_0 : i32, i32, i32, i32
  }
}

</mosaic_0001>

<llo_original>
// kernel: tpu_custom_call.1
$region0: #{tpu_custom_call.1}
  #allocation0 [shape = 'u32[]', space=smem, size = 0x4, offset = 0x4, fixed_abs, tag = 'smem constant byte address 0x4 - core index']
  #allocation1 [shape = 'u32[72,128]{1,0:T(1,128)}', space=vmem, size = 0x9000, scoped, tag = 'internal scratch']
  #allocation2 [shape = 'f32[2,10,16,128]{3,2,1,0:T(8,128)}', space=vmem, size = 0x28000, scoped, tag = 'scratch operand']
  #allocation3 [shape = 's32[6]{0}', space=sflag, size = 0x18, scoped, tag = 'scratch operand']
  #allocation10 [shape = 's32[]', space=sflag, size = 0x4, offset = 0, fixed_abs, tag = 'sflag constant byte address 0x0 - dummy sync flag']
  #allocation11 [shape = 's32[]', space=sflag, size = 0x4, offset = 0, fixed_abs, tag = 'sflag constant byte address 0x0 - dummy sync flag']
  #allocation12 [shape = 'u32[]', space=smem, size = 0x4, offset = 0x44, fixed_abs, tag = 'smem constant byte address 0x44 - assertion arg 0']
  #allocation13 [shape = 'u32[]', space=smem, size = 0x4, offset = 0x48, fixed_abs, tag = 'smem constant byte address 0x48 - assertion arg 1']
  #allocation14 [shape = 's32[]', space=sflag, size = 0x4, offset = 0, fixed_abs, tag = 'sflag constant byte address 0x0 - dummy sync flag']
  #allocation15 [shape = 's32[]', space=sflag, size = 0x4, offset = 0, fixed_abs, tag = 'sflag constant byte address 0x0 - dummy sync flag']
  #allocation16 [shape = 's32[]', space=sflag, size = 0x4, offset = 0, fixed_abs, tag = 'sflag constant byte address 0x0 - dummy sync flag']
  #allocation17 [shape = 's32[]', space=sflag, size = 0x4, offset = 0, fixed_abs, tag = 'sflag constant byte address 0x0 - dummy sync flag']
  #allocation18 [shape = 's32[]', space=sflag, size = 0x4, offset = 0, fixed_abs, tag = 'sflag constant byte address 0x0 - dummy sync flag']
  #allocation19 [shape = 's32[]', space=sflag, size = 0x4, offset = 0, fixed_abs, tag = 'sflag constant byte address 0x0 - dummy sync flag']
  #allocation20 [shape = 's32[]', space=sflag, size = 0x4, offset = 0, fixed_abs, tag = 'sflag constant byte address 0x0 - dummy sync flag']
  #allocation21 [shape = 's32[]', space=sflag, size = 0x4, offset = 0, fixed_abs, tag = 'sflag constant byte address 0x0 - dummy sync flag']
  #allocation22 [shape = 's32[]', space=sflag, size = 0x4, offset = 0, fixed_abs, tag = 'sflag constant byte address 0x0 - dummy sync flag']
  #allocation23 [shape = 's32[]', space=sflag, size = 0x4, offset = 0, fixed_abs, tag = 'sflag constant byte address 0x0 - dummy sync flag']
  %s0 = inlined_call_operand.hbm [shape: f32[2,16,16,128], index: 0, kind: input, shape index: {}]
  %s1 = inlined_call_operand.hbm [shape: bf16[128,128], index: 1, kind: input, shape index: {}]
  %s2 = inlined_call_operand.vmem [shape: f32[1,128], index: 2, kind: input, shape index: {}]
  %s3 = inlined_call_operand.vmem [shape: f32[1,128], index: 3, kind: input, shape index: {}]
  %s4 = inlined_call_operand.hbm [shape: bf16[3,384,128], index: 4, kind: input, shape index: {}]
  %s5 = inlined_call_operand.vmem [shape: f32[1,128], index: 5, kind: input, shape index: {}]
  %s6 = inlined_call_operand.vmem [shape: f32[1,128], index: 6, kind: input, shape index: {}]
  %s7 = inlined_call_operand.hbm [shape: f32[2,16,16,128], index: 7, kind: output, shape index: {}]
  %s8 = sld [smem:[#allocation0]]
  $region121: #{tpu_custom_call.1} parent=0
    _
  %s10 = ssub.s32 1, %s8
  %s11 = scalar_select 0, %s10, %s8
  $region1: #{tpu_custom_call.1} parent=0
    #allocation4 [shape = 'u8[32768]{0}', space=vmem, size = 0x8000, scoped, tag = 'input window, operand 1, single buffered']
    #allocation5 [shape = 's32[2]{0}', space=sflag, size = 0x8, scoped, tag = 'scoped memory for tpu_custom_call.1']
    #allocation6 [shape = 's32[2]{0}', space=sflag, size = 0x8, scoped, tag = 'scoped memory for tpu_custom_call.1']
    #allocation7 [shape = 'u8[294912]{0}', space=vmem, size = 0x48000, scoped, tag = 'input window, operand 4, single buffered']
    #allocation8 [shape = 's32[1]{0}', space=sflag, size = 0x4, scoped, tag = 'scoped memory for tpu_custom_call.1']
    #allocation9 [shape = 'u8[131072]{0}', space=vmem, size = 0x20000, scoped, tag = 'output window, operand 0']
    %12 = vsyncpa [#allocation5], 0
    %13 = vsyncpa [#allocation8], 0
    %14 = vsyncpa [#allocation6], 0
    %s15 = scalar_lea.sflag [#allocation6], 1
    %16 = vsyncpa %s15, 0
    loop: start=0, step=1, limit=6
    $region2: #{tpu_custom_call.1} parent=1 // loop_pre_header
      _
    $region3: #{tpu_custom_call.1} parent=1 // loop_header
      %s18 = sphi 0, %s22
      %p19 = scmp.ge.s32.totalorder %s18, 6
      %s25 = sphi 0, %s37
      %s26 = sphi 0, %s33
      %s27 = sphi 0, %s25
      %s28 = sphi 0, %s26
      %s29 = sphi 0, %s27
      %s30 = sphi 0, %s28
      %s38 = sphi 0, %s38
      %s40 = sphi 0, %s38
      %s41 = sphi 0, %s40
      %s55 = sphi 0, %s41
      %s59 = sphi 0, %s59
      %s61 = sphi 0, %s59
      %s62 = sphi 0, %s61
      %s76 = sphi 0, %s62
      %s80 = sphi 0, %s80
      %s82 = sphi 0, %s80
      %s83 = sphi 0, %s82
      %s97 = sphi 0, %s83
      %s101 = sphi 0, %s101
      %s103 = sphi 0, %s101
      %s104 = sphi 0, %s103
      %s118 = sphi 0, %s104
      %s122 = sphi 0, %s122
      %s124 = sphi 0, %s122
      %s125 = sphi 0, %s124
      %s139 = sphi 0, %s125
      %s143 = sphi 0, %s143
      %s145 = sphi 0, %s143
      %s146 = sphi 0, %s145
      %s160 = sphi 0, %s146
      %s168 = sphi 0, %s170
      %s171 = sphi 0, %s168
      %s172 = sphi 0, %s171
      %s188 = sphi 0, %s172
    $region4: #{tpu_custom_call.1} parent=1 // loop_header_branch
      %21 = sbr.rel (%p19) target = $region8
    $region5: #{tpu_custom_call.1} parent=1 // loop_body
      %s23 = ssub.s32 %s18, 1
      %s24 = ssub.s32 %s18, 2
      %s31 = sadd.s32 1, %s26
      %p32 = scmp.ge.s32.totalorder %s31, 2
      %s33 = scalar_select %p32, 0, %s31
      %s34 = sadd.s32 1, %s25
      %s35 = scalar_select %p32, %s34, %s25
      %p36 = scmp.ge.s32.totalorder %s35, 2
      %s37 = scalar_select %p36, 0, %s35
      %s39 = sadd.s32 %s38, 1
      %p42 = scmp.eq.s32.totalorder %s18, 3
      %p43 = scmp.ne.s32.totalorder %s38, %s40
      %p44 = scmp.eq.s32.totalorder %s18, 0
      %p45 = por %p43, %p44
      %p46 = scmp.ne.s32.totalorder %s38, %s40
      %p47 = scmp.eq.s32.totalorder %s23, 3
      %p48 = por %p46, %p47
      %p49 = scmp.ne.s32.totalorder %s40, %s41
      %p50 = scmp.eq.s32.totalorder %s23, 0
      %p51 = por %p49, %p50
      %p52 = scmp.ne.s32.totalorder %s40, %s41
      %p53 = scmp.eq.s32.totalorder %s24, 3
      %p54 = por %p52, %p53
      %p56 = scmp.ne.s32.totalorder %s41, %s55
      %p57 = scmp.eq.s32.totalorder %s24, 0
      %p58 = por %p56, %p57
      %s60 = sadd.s32 %s59, 1
      %p63 = scmp.eq.s32.totalorder %s18, 3
      %p64 = scmp.ne.s32.totalorder %s59, %s61
      %p65 = scmp.eq.s32.totalorder %s18, 0
      %p66 = por %p64, %p65
      %p67 = scmp.ne.s32.totalorder %s59, %s61
      %p68 = scmp.eq.s32.totalorder %s23, 3
      %p69 = por %p67, %p68
      %p70 = scmp.ne.s32.totalorder %s61, %s62
      %p71 = scmp.eq.s32.totalorder %s23, 0
      %p72 = por %p70, %p71
      %p73 = scmp.ne.s32.totalorder %s61, %s62
      %p74 = scmp.eq.s32.totalorder %s24, 3
      %p75 = por %p73, %p74
      %p77 = scmp.ne.s32.totalorder %s62, %s76
      %p78 = scmp.eq.s32.totalorder %s24, 0
      %p79 = por %p77, %p78
      %s81 = sadd.s32 %s80, 1
      %p84 = scmp.eq.s32.totalorder %s18, 3
      %p85 = scmp.ne.s32.totalorder %s80, %s82
      %p86 = scmp.eq.s32.totalorder %s18, 0
      %p87 = por %p85, %p86
      %p88 = scmp.ne.s32.totalorder %s80, %s82
      %p89 = scmp.eq.s32.totalorder %s23, 3
      %p90 = por %p88, %p89
      %p91 = scmp.ne.s32.totalorder %s82, %s83
      %p92 = scmp.eq.s32.totalorder %s23, 0
      %p93 = por %p91, %p92
      %p94 = scmp.ne.s32.totalorder %s82, %s83
      %p95 = scmp.eq.s32.totalorder %s24, 3
      %p96 = por %p94, %p95
      %p98 = scmp.ne.s32.totalorder %s83, %s97
      %p99 = scmp.eq.s32.totalorder %s24, 0
      %p100 = por %p98, %p99
      %s102 = sadd.s32 %s101, 1
      %p105 = scmp.eq.s32.totalorder %s18, 3
      %p106 = scmp.ne.s32.totalorder %s101, %s103
      %p107 = scmp.eq.s32.totalorder %s18, 0
      %p108 = por %p106, %p107
      %p109 = scmp.ne.s32.totalorder %s101, %s103
      %p110 = scmp.eq.s32.totalorder %s23, 3
      %p111 = por %p109, %p110
      %p112 = scmp.ne.s32.totalorder %s103, %s104
      %p113 = scmp.eq.s32.totalorder %s23, 0
      %p114 = por %p112, %p113
      %p115 = scmp.ne.s32.totalorder %s103, %s104
      %p116 = scmp.eq.s32.totalorder %s24, 3
      %p117 = por %p115, %p116
      %p119 = scmp.ne.s32.totalorder %s104, %s118
      %p120 = scmp.eq.s32.totalorder %s24, 0
      %p121 = por %p119, %p120
      %s123 = sadd.s32 %s122, 1
      %p126 = scmp.eq.s32.totalorder %s18, 3
      %p127 = scmp.ne.s32.totalorder %s122, %s124
      %p128 = scmp.eq.s32.totalorder %s18, 0
      %p129 = por %p127, %p128
      %p130 = scmp.ne.s32.totalorder %s122, %s124
      %p131 = scmp.eq.s32.totalorder %s23, 3
      %p132 = por %p130, %p131
      %p133 = scmp.ne.s32.totalorder %s124, %s125
      %p134 = scmp.eq.s32.totalorder %s23, 0
      %p135 = por %p133, %p134
      %p136 = scmp.ne.s32.totalorder %s124, %s125
      %p137 = scmp.eq.s32.totalorder %s24, 3
      %p138 = por %p136, %p137
      %p140 = scmp.ne.s32.totalorder %s125, %s139
      %p141 = scmp.eq.s32.totalorder %s24, 0
      %p142 = por %p140, %p141
      %s144 = sadd.s32 %s143, 1
      %p147 = scmp.eq.s32.totalorder %s18, 3
      %p148 = scmp.ne.s32.totalorder %s143, %s145
      %p149 = scmp.eq.s32.totalorder %s18, 0
      %p150 = por %p148, %p149
      %p151 = scmp.ne.s32.totalorder %s143, %s145
      %p152 = scmp.eq.s32.totalorder %s23, 3
      %p153 = por %p151, %p152
      %p154 = scmp.ne.s32.totalorder %s145, %s146
      %p155 = scmp.eq.s32.totalorder %s23, 0
      %p156 = por %p154, %p155
      %p157 = scmp.ne.s32.totalorder %s145, %s146
      %p158 = scmp.eq.s32.totalorder %s24, 3
      %p159 = por %p157, %p158
      %p161 = scmp.ne.s32.totalorder %s146, %s160
      %p162 = scmp.eq.s32.totalorder %s24, 0
      %p163 = por %p161, %p162
      %s164 = ssub.s32 %s25, %s37
      %s165 = ssub.s32 %s26, %s33
      %s166 = sor.u32 %s164, %s165
      %p167 = scmp.eq.s32.totalorder %s166, 0
      %s169 = sadd.s32 %s168, 1
      %s170 = scalar_select %p167, %s168, %s169
      %p173 = pneg %p167
      %p174 = scmp.eq.s32.totalorder %s18, 3
      %p175 = por %p173, %p174
      %p176 = scmp.ne.s32.totalorder %s168, %s171
      %p177 = scmp.eq.s32.totalorder %s18, 0
      %p178 = por %p176, %p177
      %p179 = scmp.ne.s32.totalorder %s168, %s171
      %p180 = scmp.eq.s32.totalorder %s23, 3
      %p181 = por %p179, %p180
      %p182 = scmp.ne.s32.totalorder %s171, %s172
      %p183 = scmp.eq.s32.totalorder %s23, 0
      %p184 = por %p182, %p183
      %p185 = scmp.ne.s32.totalorder %s171, %s172
      %p186 = scmp.eq.s32.totalorder %s24, 3
      %p187 = por %p185, %p186
      %p189 = scmp.ne.s32.totalorder %s172, %s188
      %p190 = scmp.eq.s32.totalorder %s24, 0
      %p191 = por %p189, %p190
      %p192 = scmp.le.s32.totalorder 1, %s18
      %p193 = scmp.lt.s32.totalorder %s18, 5
      %p194 = pnand %p192, %p193
      %p195 = pneg %p194
      // Predicated region
      $region9: #{tpu_custom_call.1} parent=5 // pred_check
        _
      $region10: #{tpu_custom_call.1} parent=5 // pred_check_branch
        %197 = sbr.rel (%p194) target = $region12
      $region11: #{tpu_custom_call.1} parent=5 // pred_region
        %s198 = ssub.s32 %s18, 1
        // Predicated region
        $region13: #{tpu_custom_call.1} parent=11 // pred_check
          %p199 = pneg %p51
        $region14: #{tpu_custom_call.1} parent=11 // pred_check_branch
          %201 = sbr.rel (%p199) target = $region16
        $region15: #{tpu_custom_call.1} parent=11 // pred_region
          %203 = vsyncadd [#allocation5], 0
          %s204 = sshll.u32 %s1, 4
          %s205 = int_to_ptr.hbm [resolvable:$true] %s204
          %s206 = sshll.u32 [#allocation4], 4
          %s207 = int_to_ptr.vmem [resolvable:$true] %s206
          %212 = dma.hbm_to_vmem [thread:$0]  %s205, 1024, %s207, [#allocation5], 64, 64, 4
        $region16: #{tpu_custom_call.1} parent=11 // pred_fallthru
          _
        // Predicated region
        $region17: #{tpu_custom_call.1} parent=11 // pred_check
          %p213 = pneg %p72
        $region18: #{tpu_custom_call.1} parent=11 // pred_check_branch
          %215 = sbr.rel (%p213) target = $region20
        $region19: #{tpu_custom_call.1} parent=11 // pred_region
          _
        $region20: #{tpu_custom_call.1} parent=11 // pred_fallthru
          _
        // Predicated region
        $region21: #{tpu_custom_call.1} parent=11 // pred_check
          %p216 = pneg %p93
        $region22: #{tpu_custom_call.1} parent=11 // pred_check_branch
          %218 = sbr.rel (%p216) target = $region24
        $region23: #{tpu_custom_call.1} parent=11 // pred_region
          _
        $region24: #{tpu_custom_call.1} parent=11 // pred_fallthru
          _
        // Predicated region
        $region25: #{tpu_custom_call.1} parent=11 // pred_check
          %p219 = pneg %p114
        $region26: #{tpu_custom_call.1} parent=11 // pred_check_branch
          %221 = sbr.rel (%p219) target = $region28
        $region27: #{tpu_custom_call.1} parent=11 // pred_region
          %223 = vsyncadd [#allocation8], 0
          %s224 = sshll.u32 %s4, 4
          %s225 = int_to_ptr.hbm [resolvable:$true] %s224
          %s226 = sshll.u32 [#allocation7], 4
          %s227 = int_to_ptr.vmem [resolvable:$true] %s226
          %232 = dma.hbm_to_vmem [thread:$0]  %s225, 9216, %s227, [#allocation8], 64, 64, 4
        $region28: #{tpu_custom_call.1} parent=11 // pred_fallthru
          _
        // Predicated region
        $region29: #{tpu_custom_call.1} parent=11 // pred_check
          %p233 = pneg %p135
        $region30: #{tpu_custom_call.1} parent=11 // pred_check_branch
          %235 = sbr.rel (%p233) target = $region32
        $region31: #{tpu_custom_call.1} parent=11 // pred_region
          _
        $region32: #{tpu_custom_call.1} parent=11 // pred_fallthru
          _
        // Predicated region
        $region33: #{tpu_custom_call.1} parent=11 // pred_check
          %p236 = pneg %p156
        $region34: #{tpu_custom_call.1} parent=11 // pred_check_branch
          %238 = sbr.rel (%p236) target = $region36
        $region35: #{tpu_custom_call.1} parent=11 // pred_region
          _
        $region36: #{tpu_custom_call.1} parent=11 // pred_fallthru
          _
      $region12: #{tpu_custom_call.1} parent=5 // pred_fallthru
        _
      %p239 = scmp.lt.s32.totalorder %s18, 4
      // Predicated region
      $region37: #{tpu_custom_call.1} parent=5 // pred_check
        %p240 = pneg %p239
      $region38: #{tpu_custom_call.1} parent=5 // pred_check_branch
        %242 = sbr.rel (%p240) target = $region40
      $region39: #{tpu_custom_call.1} parent=5 // pred_region
        _
      $region40: #{tpu_custom_call.1} parent=5 // pred_fallthru
        _
      %p243 = scmp.le.s32.totalorder 1, %s18
      %p244 = scmp.lt.s32.totalorder %s18, 5
      %p245 = pnand %p243, %p244
      %p246 = pneg %p245
      // Predicated region
      $region41: #{tpu_custom_call.1} parent=5 // pred_check
        _
      $region42: #{tpu_custom_call.1} parent=5 // pred_check_branch
        %248 = sbr.rel (%p245) target = $region44
      $region43: #{tpu_custom_call.1} parent=5 // pred_region
        %s249 = ssub.s32 %s18, 1
        // Predicated region
        $region45: #{tpu_custom_call.1} parent=43 // pred_check
          %p250 = pneg %p51
        $region46: #{tpu_custom_call.1} parent=43 // pred_check_branch
          %252 = sbr.rel (%p250) target = $region48
        $region47: #{tpu_custom_call.1} parent=43 // pred_region
          %254 = dma.done [#allocation5], 1024
        $region48: #{tpu_custom_call.1} parent=43 // pred_fallthru
          _
        // Predicated region
        $region49: #{tpu_custom_call.1} parent=43 // pred_check
          %p255 = pneg %p114
        $region50: #{tpu_custom_call.1} parent=43 // pred_check_branch
          %257 = sbr.rel (%p255) target = $region52
        $region51: #{tpu_custom_call.1} parent=43 // pred_region
          %259 = dma.done [#allocation8], 9216
        $region52: #{tpu_custom_call.1} parent=43 // pred_fallthru
          _
        %p260 = pneg %p51
        %p261 = pneg %p48
        %p262 = pneg %p72
        %p263 = pneg %p69
        %p264 = pneg %p93
        %p265 = pneg %p90
        %p266 = pneg %p114
        %p267 = pneg %p111
        %p268 = pneg %p135
        %p269 = pneg %p132
        %p270 = pneg %p156
        %p271 = pneg %p153
        %p272 = pneg %p184
        %p273 = pneg %p181
        %s274 = sand.u32 %s171, 1
        %s275 = scalar_lea.sflag [#allocation6], %s274
        %s276 = sand.u32 %s171, 1
        %s277 = smul.addr %s276, 128
        %s278 = scalar_lea.vmem [#allocation9], %s277
        %s279 = smul.u32 8, %s28
        %p281 = scmp.lt.s32.totalorder %s28, 0
        %s282 = ssub.s32 0, %s28
        %s283 = scalar_select %p281, %s282, %s28
        %s284 = sand.u32 %s283, 1
        %s285 = ssub.s32 0, %s284
        %s286 = scalar_select %p281, %s285, %s284
        %p287 = scmp.ne.s32.totalorder %s286, 0
        %p288 = scmp.lt.s32.totalorder %s286, 0
        %p289 = pnand %p288, %p287
        %p290 = pneg %p289
        %s291 = sadd.s32 %s286, 2
        %s292 = scalar_select %p290, %s291, %s286
        %p293 = scmp.eq.s32.totalorder %s28, 0
        // Predicated region
        $region53: #{tpu_custom_call.1} parent=43 // pred_check
          %p294 = pneg %p293
        $region54: #{tpu_custom_call.1} parent=43 // pred_check_branch
          %296 = sbr.rel (%p294) target = $region56
        $region55: #{tpu_custom_call.1} parent=43 // pred_region
          %s297 = smul.u32 %s28, 8
          %s298 = smul.u32 %s297, 16
          %s299 = smul.u32 %s27, 256
          %s300 = sadd.s32 %s298, %s299
          %s301 = scalar_lea.hbm %s0, %s300
          %s302 = smul.u32 %s292, 160
          %s303 = sadd.s32 16, %s302
          %s304 = scalar_lea.vmem [#allocation2], %s303
          %s305 = smul.u32 %s292, 3
          %s306 = scalar_lea.sflag [#allocation3], %s305
          // Predicated region
          $region57: #{tpu_custom_call.1} parent=55 // pred_check
            _
          $region58: #{tpu_custom_call.1} parent=55 // pred_check_branch
            %308 = sbr.rel target = $region60
          $region59: #{tpu_custom_call.1} parent=55 // pred_region
            %309 = sst [smem:[#allocation12]] [#allocation11]
            %310 = sst [smem:[#allocation13]] [#allocation10]
          $region60: #{tpu_custom_call.1} parent=55 // pred_fallthru
            _
          %312 = shalt.err (0)
          %s314 = sshll.u32 %s301, 4
          %s315 = int_to_ptr.hbm [resolvable:$true] %s314
          %s316 = sshll.u32 %s304, 4
          %s317 = int_to_ptr.vmem [resolvable:$true] %s316
          %319 = dma.hbm_to_vmem [thread:$0]  %s315, 2048, %s317, %s306
          %p320 = scmp.gt.s32.totalorder %s28, 0
          // Predicated region
          $region61: #{tpu_custom_call.1} parent=55 // pred_check
            %p321 = pneg %p320
          $region62: #{tpu_custom_call.1} parent=55 // pred_check_branch
            %323 = sbr.rel (%p321) target = $region64
          $region63: #{tpu_custom_call.1} parent=55 // pred_region
            %s324 = ssub.s32 %s297, 1
            %s325 = smul.u32 %s324, 16
            %s326 = sadd.s32 %s325, %s299
            %s327 = scalar_lea.hbm %s0, %s326
            %s328 = scalar_lea.vmem [#allocation2], %s302
            %s329 = sadd.s32 1, %s305
            %s330 = scalar_lea.sflag [#allocation3], %s329
            // Predicated region
            $region65: #{tpu_custom_call.1} parent=63 // pred_check
              _
            $region66: #{tpu_custom_call.1} parent=63 // pred_check_branch
              %332 = sbr.rel target = $region68
            $region67: #{tpu_custom_call.1} parent=63 // pred_region
              %333 = sst [smem:[#allocation12]] [#allocation15]
              %334 = sst [smem:[#allocation13]] [#allocation14]
            $region68: #{tpu_custom_call.1} parent=63 // pred_fallthru
              _
            %336 = shalt.err (0)
            %s338 = sshll.u32 %s327, 4
            %s339 = int_to_ptr.hbm [resolvable:$true] %s338
            %s340 = sshll.u32 %s328, 4
            %s341 = int_to_ptr.vmem [resolvable:$true] %s340
            %343 = dma.hbm_to_vmem [thread:$0]  %s339, 256, %s341, %s330
          $region64: #{tpu_custom_call.1} parent=55 // pred_fallthru
            _
          %p344 = scmp.lt.s32.totalorder %s28, 1
          // Predicated region
          $region69: #{tpu_custom_call.1} parent=55 // pred_check
            %p345 = pneg %p344
          $region70: #{tpu_custom_call.1} parent=55 // pred_check_branch
            %347 = sbr.rel (%p345) target = $region72
          $region71: #{tpu_custom_call.1} parent=55 // pred_region
            %s348 = sadd.s32 %s28, 1
            %s349 = smul.u32 %s348, 8
            %s350 = smul.u32 %s349, 16
            %s351 = sadd.s32 %s350, %s299
            %s352 = scalar_lea.hbm %s0, %s351
            %s353 = sadd.s32 144, %s302
            %s354 = scalar_lea.vmem [#allocation2], %s353
            %s355 = sadd.s32 2, %s305
            %s356 = scalar_lea.sflag [#allocation3], %s355
            // Predicated region
            $region73: #{tpu_custom_call.1} parent=71 // pred_check
              _
            $region74: #{tpu_custom_call.1} parent=71 // pred_check_branch
              %358 = sbr.rel target = $region76
            $region75: #{tpu_custom_call.1} parent=71 // pred_region
              %359 = sst [smem:[#allocation12]] [#allocation17]
              %360 = sst [smem:[#allocation13]] [#allocation16]
            $region76: #{tpu_custom_call.1} parent=71 // pred_fallthru
              _
            %362 = shalt.err (0)
            %s364 = sshll.u32 %s352, 4
            %s365 = int_to_ptr.hbm [resolvable:$true] %s364
            %s366 = sshll.u32 %s354, 4
            %s367 = int_to_ptr.vmem [resolvable:$true] %s366
            %369 = dma.hbm_to_vmem [thread:$0]  %s365, 256, %s367, %s356
          $region72: #{tpu_custom_call.1} parent=55 // pred_fallthru
            _
        $region56: #{tpu_custom_call.1} parent=43 // pred_fallthru
          _
        %s370 = sadd.s32 %s28, 1
        %p371 = scmp.lt.s32.totalorder %s370, 2
        // Predicated region
        $region77: #{tpu_custom_call.1} parent=43 // pred_check
          %p372 = pneg %p371
        $region78: #{tpu_custom_call.1} parent=43 // pred_check_branch
          %374 = sbr.rel (%p372) target = $region80
        $region79: #{tpu_custom_call.1} parent=43 // pred_region
          %s375 = ssub.s32 1, %s292
          %s376 = smul.u32 %s370, 8
          %s377 = smul.u32 %s376, 16
          %s378 = smul.u32 %s27, 256
          %s379 = sadd.s32 %s377, %s378
          %s380 = scalar_lea.hbm %s0, %s379
          %s381 = smul.u32 %s375, 160
          %s382 = sadd.s32 16, %s381
          %s383 = scalar_lea.vmem [#allocation2], %s382
          %s384 = smul.u32 %s375, 3
          %s385 = scalar_lea.sflag [#allocation3], %s384
          // Predicated region
          $region81: #{tpu_custom_call.1} parent=79 // pred_check
            _
          $region82: #{tpu_custom_call.1} parent=79 // pred_check_branch
            %387 = sbr.rel target = $region84
          $region83: #{tpu_custom_call.1} parent=79 // pred_region
            %388 = sst [smem:[#allocation12]] [#allocation19]
            %389 = sst [smem:[#allocation13]] [#allocation18]
          $region84: #{tpu_custom_call.1} parent=79 // pred_fallthru
            _
          %391 = shalt.err (0)
          %s393 = sshll.u32 %s380, 4
          %s394 = int_to_ptr.hbm [resolvable:$true] %s393
          %s395 = sshll.u32 %s383, 4
          %s396 = int_to_ptr.vmem [resolvable:$true] %s395
          %398 = dma.hbm_to_vmem [thread:$0]  %s394, 2048, %s396, %s385
          %p399 = scmp.gt.s32.totalorder %s370, 0
          // Predicated region
          $region85: #{tpu_custom_call.1} parent=79 // pred_check
            %p400 = pneg %p399
          $region86: #{tpu_custom_call.1} parent=79 // pred_check_branch
            %402 = sbr.rel (%p400) target = $region88
          $region87: #{tpu_custom_call.1} parent=79 // pred_region
            %s403 = ssub.s32 %s376, 1
            %s404 = smul.u32 %s403, 16
            %s405 = sadd.s32 %s404, %s378
            %s406 = scalar_lea.hbm %s0, %s405
            %s407 = scalar_lea.vmem [#allocation2], %s381
            %s408 = sadd.s32 1, %s384
            %s409 = scalar_lea.sflag [#allocation3], %s408
            // Predicated region
            $region89: #{tpu_custom_call.1} parent=87 // pred_check
              _
            $region90: #{tpu_custom_call.1} parent=87 // pred_check_branch
              %411 = sbr.rel target = $region92
            $region91: #{tpu_custom_call.1} parent=87 // pred_region
              %412 = sst [smem:[#allocation12]] [#allocation21]
              %413 = sst [smem:[#allocation13]] [#allocation20]
            $region92: #{tpu_custom_call.1} parent=87 // pred_fallthru
              _
            %415 = shalt.err (0)
            %s417 = sshll.u32 %s406, 4
            %s418 = int_to_ptr.hbm [resolvable:$true] %s417
            %s419 = sshll.u32 %s407, 4
            %s420 = int_to_ptr.vmem [resolvable:$true] %s419
            %422 = dma.hbm_to_vmem [thread:$0]  %s418, 256, %s420, %s409
          $region88: #{tpu_custom_call.1} parent=79 // pred_fallthru
            _
          %p423 = scmp.lt.s32.totalorder %s370, 1
          // Predicated region
          $region93: #{tpu_custom_call.1} parent=79 // pred_check
            %p424 = pneg %p423
          $region94: #{tpu_custom_call.1} parent=79 // pred_check_branch
            %426 = sbr.rel (%p424) target = $region96
          $region95: #{tpu_custom_call.1} parent=79 // pred_region
            %s427 = sadd.s32 %s28, 2
            %s428 = smul.u32 %s427, 8
            %s429 = smul.u32 %s428, 16
            %s430 = sadd.s32 %s429, %s378
            %s431 = scalar_lea.hbm %s0, %s430
            %s432 = sadd.s32 144, %s381
            %s433 = scalar_lea.vmem [#allocation2], %s432
            %s434 = sadd.s32 2, %s384
            %s435 = scalar_lea.sflag [#allocation3], %s434
            // Predicated region
            $region97: #{tpu_custom_call.1} parent=95 // pred_check
              _
            $region98: #{tpu_custom_call.1} parent=95 // pred_check_branch
              %437 = sbr.rel target = $region100
            $region99: #{tpu_custom_call.1} parent=95 // pred_region
              %438 = sst [smem:[#allocation12]] [#allocation23]
              %439 = sst [smem:[#allocation13]] [#allocation22]
            $region100: #{tpu_custom_call.1} parent=95 // pred_fallthru
              _
            %441 = shalt.err (0)
            %s443 = sshll.u32 %s431, 4
            %s444 = int_to_ptr.hbm [resolvable:$true] %s443
            %s445 = sshll.u32 %s433, 4
            %s446 = int_to_ptr.vmem [resolvable:$true] %s445
            %448 = dma.hbm_to_vmem [thread:$0]  %s444, 256, %s446, %s435
          $region96: #{tpu_custom_call.1} parent=79 // pred_fallthru
            _
        $region80: #{tpu_custom_call.1} parent=43 // pred_fallthru
          _
        %s449 = smul.u32 %s292, 3
        %s450 = scalar_lea.sflag [#allocation3], %s449
        %s451 = smul.u32 8, 16
        %s452 = smul.u32 %s451, 1
        %s453 = sshll.u32 %s452, 4
        %454 = dma.done %s450, %s453
        %p455 = scmp.gt.s32.totalorder %s28, 0
        // Predicated region
        $region101: #{tpu_custom_call.1} parent=43 // pred_check
          %p456 = pneg %p455
        $region102: #{tpu_custom_call.1} parent=43 // pred_check_branch
          %458 = sbr.rel (%p456) target = $region104
        $region103: #{tpu_custom_call.1} parent=43 // pred_region
          %s459 = sadd.s32 1, %s449
          %s460 = scalar_lea.sflag [#allocation3], %s459
          %s461 = smul.u32 1, 16
          %s462 = smul.u32 %s461, 1
          %s463 = sshll.u32 %s462, 4
          %464 = dma.done %s460, %s463
        $region104: #{tpu_custom_call.1} parent=43 // pred_fallthru
          _
        %p465 = scmp.lt.s32.totalorder %s28, 1
        // Predicated region
        $region105: #{tpu_custom_call.1} parent=43 // pred_check
          %p466 = pneg %p465
        $region106: #{tpu_custom_call.1} parent=43 // pred_check_branch
          %468 = sbr.rel (%p466) target = $region108
        $region107: #{tpu_custom_call.1} parent=43 // pred_region
          %s469 = sadd.s32 2, %s449
          %s470 = scalar_lea.sflag [#allocation3], %s469
          %s471 = smul.u32 1, 16
          %s472 = smul.u32 %s471, 1
          %s473 = sshll.u32 %s472, 4
          %474 = dma.done %s470, %s473
        $region108: #{tpu_custom_call.1} parent=43 // pred_fallthru
          _
        %s475 = smul.u32 %s292, 160
        %s476 = scalar_lea.vmem [#allocation2], %s475
        %v477 = vld [vmem:[%s476] sm:$0xff]
        %v478 = vld [vmem:[%s476 + $0x8] sm:$0xff]
        %v479 = vld [vmem:[%s476 + $0x10] sm:$0xff]
        %v480 = vld [vmem:[%s476 + $0x18] sm:$0xff]
        %v481 = vld [vmem:[%s476 + $0x20] sm:$0xff]
        %v482 = vld [vmem:[%s476 + $0x28] sm:$0xff]
        %v483 = vld [vmem:[%s476 + $0x30] sm:$0xff]
        %v484 = vld [vmem:[%s476 + $0x38] sm:$0xff]
        %v485 = vld [vmem:[%s476 + $0x40] sm:$0xff]
        %v486 = vld [vmem:[%s476 + $0x48] sm:$0xff]
        %v487 = vld [vmem:[%s476 + $0x50] sm:$0xff]
        %v488 = vld [vmem:[%s476 + $0x58] sm:$0xff]
        %v489 = vld [vmem:[%s476 + $0x60] sm:$0xff]
        %v490 = vld [vmem:[%s476 + $0x68] sm:$0xff]
        %v491 = vld [vmem:[%s476 + $0x70] sm:$0xff]
        %v492 = vld [vmem:[%s476 + $0x78] sm:$0xff]
        %v493 = vld [vmem:[%s476 + $0x80] sm:$0xff]
        %v494 = vld [vmem:[%s476 + $0x88] sm:$0xff]
        %v495 = vld [vmem:[%s476 + $0x90] sm:$0xff]
        %v496 = vld [vmem:[%s476 + $0x98] sm:$0xff]
        %v497 = vpack.c.bf16 %v477, %v477
        %v498 = vpack.c.bf16 %v478, %v478
        %v499 = vpack.c.bf16 %v479, %v479
        %v500 = vpack.c.bf16 %v480, %v480
        %v501 = vpack.c.bf16 %v481, %v481
        %v502 = vpack.c.bf16 %v482, %v482
        %v503 = vpack.c.bf16 %v483, %v483
        %v504 = vpack.c.bf16 %v484, %v484
        %v505 = vpack.c.bf16 %v485, %v485
        %v506 = vpack.c.bf16 %v486, %v486
        %v507 = vpack.c.bf16 %v487, %v487
        %v508 = vpack.c.bf16 %v488, %v488
        %v509 = vpack.c.bf16 %v489, %v489
        %v510 = vpack.c.bf16 %v490, %v490
        %v511 = vpack.c.bf16 %v491, %v491
        %v512 = vpack.c.bf16 %v492, %v492
        %v513 = vpack.c.bf16 %v493, %v493
        %v514 = vpack.c.bf16 %v494, %v494
        %v515 = vpack.c.bf16 %v495, %v495
        %v516 = vpack.c.bf16 %v496, %v496
        %v517 = vld [vmem:[#allocation4] sm:$0xf]
        %v518 = vld [vmem:[#allocation4 + $0x4] sm:$0xf]
        %v519 = vld [vmem:[#allocation4 + $0x8] sm:$0xf]
        %v520 = vld [vmem:[#allocation4 + $0xc] sm:$0xf]
        %v521 = vld [vmem:[#allocation4 + $0x10] sm:$0xf]
        %v522 = vld [vmem:[#allocation4 + $0x14] sm:$0xf]
        %v523 = vld [vmem:[#allocation4 + $0x18] sm:$0xf]
        %v524 = vld [vmem:[#allocation4 + $0x1c] sm:$0xf]
        %v525 = vld [vmem:[#allocation4 + $0x20] sm:$0xf]
        %v526 = vld [vmem:[#allocation4 + $0x24] sm:$0xf]
        %v527 = vld [vmem:[#allocation4 + $0x28] sm:$0xf]
        %v528 = vld [vmem:[#allocation4 + $0x2c] sm:$0xf]
        %v529 = vld [vmem:[#allocation4 + $0x30] sm:$0xf]
        %v530 = vld [vmem:[#allocation4 + $0x34] sm:$0xf]
        %v531 = vld [vmem:[#allocation4 + $0x38] sm:$0xf]
        %v532 = vld [vmem:[#allocation4 + $0x3c] sm:$0xf]
        %v553 = vunpack.c.l.b16 %v497
        %v554 = vunpack.c.l.b16 %v498
        %v555 = vunpack.c.l.b16 %v499
        %v556 = vunpack.c.l.b16 %v500
        %v557 = vunpack.c.l.b16 %v501
        %v558 = vunpack.c.l.b16 %v502
        %v559 = vunpack.c.l.b16 %v503
        %v560 = vunpack.c.l.b16 %v504
        %v561 = vunpack.c.l.b16 %v505
        %v562 = vunpack.c.l.b16 %v506
        %v563 = vunpack.c.l.b16 %v507
        %v564 = vunpack.c.l.b16 %v508
        %v565 = vunpack.c.l.b16 %v509
        %v566 = vunpack.c.l.b16 %v510
        %v567 = vunpack.c.l.b16 %v511
        %v568 = vunpack.c.l.b16 %v512
        %v569 = vunpack.c.l.b16 %v513
        %v570 = vunpack.c.l.b16 %v514
        %v571 = vunpack.c.l.b16 %v515
        %v572 = vunpack.c.l.b16 %v516
        %v573 = vpack.c.b16 %v554, %v553
        %v574 = vpack.c.b16 %v556, %v555
        %v575 = vpack.c.b16 %v558, %v557
        %v576 = vpack.c.b16 %v560, %v559
        %v577 = vpack.c.b16 %v562, %v561
        %v578 = vpack.c.b16 %v564, %v563
        %v579 = vpack.c.b16 %v566, %v565
        %v580 = vpack.c.b16 %v568, %v567
        %v581 = vpack.c.b16 %v570, %v569
        %v582 = vpack.c.b16 %v572, %v571
        %v609 = vunpack.c.l.b16 %v517
        %v610 = vunpack.c.l.b16 %v518
        %v611 = vunpack.c.l.b16 %v519
        %v612 = vunpack.c.l.b16 %v520
        %v613 = vunpack.c.l.b16 %v521
        %v614 = vunpack.c.l.b16 %v522
        %v615 = vunpack.c.l.b16 %v523
        %v616 = vunpack.c.l.b16 %v524
        %v617 = vunpack.c.l.b16 %v525
        %v618 = vunpack.c.l.b16 %v526
        %v619 = vunpack.c.l.b16 %v527
        %v620 = vunpack.c.l.b16 %v528
        %v621 = vunpack.c.l.b16 %v529
        %v622 = vunpack.c.l.b16 %v530
        %v623 = vunpack.c.l.b16 %v531
        %v624 = vunpack.c.l.b16 %v532
        %v625 = vpack.c.b16 %v610, %v609
        %v626 = vpack.c.b16 %v612, %v611
        %v627 = vpack.c.b16 %v614, %v613
        %v628 = vpack.c.b16 %v616, %v615
        %v629 = vpack.c.b16 %v618, %v617
        %v630 = vpack.c.b16 %v620, %v619
        %v631 = vpack.c.b16 %v622, %v621
        %v632 = vpack.c.b16 %v624, %v623
        %641 = vmatpush.bf16.msra.mxu0 %v632
        %642 = vmatpush.bf16.msra.mxu0 %v631
        %643 = vmatpush.bf16.msra.mxu0 %v630
        %644 = vmatpush.bf16.msra.mxu0 %v629
        %645 = vmatpush.bf16.msra.mxu0 %v628
        %646 = vmatpush.bf16.msra.mxu0 %v627
        %647 = vmatpush.bf16.msra.mxu0 %v626
        %648 = vmatpush.bf16.msra.mxu0 %v625
        %649 = vmatmul.bf16.gmra.mxu0 %v573
        %v650 = vpop.f32.mrf.mxu0
        %v651 = vadd.f32 0.0, %v650
        %v652 = vpop.f32.mrf.mxu0
        %v653 = vadd.f32 0.0, %v652
        %654 = vmatmul.bf16.gmra.mxu0 %v574
        %v655 = vpop.f32.mrf.mxu0
        %v656 = vadd.f32 0.0, %v655
        %v657 = vpop.f32.mrf.mxu0
        %v658 = vadd.f32 0.0, %v657
        %659 = vmatmul.bf16.gmra.mxu0 %v575
        %v660 = vpop.f32.mrf.mxu0
        %v661 = vadd.f32 0.0, %v660
        %v662 = vpop.f32.mrf.mxu0
        %v663 = vadd.f32 0.0, %v662
        %664 = vmatmul.bf16.gmra.mxu0 %v576
        %v665 = vpop.f32.mrf.mxu0
        %v666 = vadd.f32 0.0, %v665
        %v667 = vpop.f32.mrf.mxu0
        %v668 = vadd.f32 0.0, %v667
        %669 = vmatmul.bf16.gmra.mxu0 %v577
        %v670 = vpop.f32.mrf.mxu0
        %v671 = vadd.f32 0.0, %v670
        %v672 = vpop.f32.mrf.mxu0
        %v673 = vadd.f32 0.0, %v672
        %674 = vmatmul.bf16.gmra.mxu0 %v578
        %v675 = vpop.f32.mrf.mxu0
        %v676 = vadd.f32 0.0, %v675
        %v677 = vpop.f32.mrf.mxu0
        %v678 = vadd.f32 0.0, %v677
        %679 = vmatmul.bf16.gmra.mxu0 %v579
        %v680 = vpop.f32.mrf.mxu0
        %v681 = vadd.f32 0.0, %v680
        %v682 = vpop.f32.mrf.mxu0
        %v683 = vadd.f32 0.0, %v682
        %684 = vmatmul.bf16.gmra.mxu0 %v580
        %v685 = vpop.f32.mrf.mxu0
        %v686 = vadd.f32 0.0, %v685
        %v687 = vpop.f32.mrf.mxu0
        %v688 = vadd.f32 0.0, %v687
        %689 = vmatmul.bf16.gmra.mxu0 %v581
        %v690 = vpop.f32.mrf.mxu0
        %v691 = vadd.f32 0.0, %v690
        %v692 = vpop.f32.mrf.mxu0
        %v693 = vadd.f32 0.0, %v692
        %694 = vmatmul.bf16.gmra.mxu0 %v582
        %v695 = vpop.f32.mrf.mxu0
        %v696 = vadd.f32 0.0, %v695
        %v697 = vpop.f32.mrf.mxu0
        %v698 = vadd.f32 0.0, %v697
        %699 = vdwg.mxu0
        %v700 = vld [vmem:[%s2] sm:$0x1]
        %v702 = vperm.slane %v700, 0
        %v704 = vmul.f32 %v651, %v702
        %v705 = vmul.f32 %v653, %v702
        %v706 = vmul.f32 %v656, %v702
        %v707 = vmul.f32 %v658, %v702
        %v708 = vmul.f32 %v661, %v702
        %v709 = vmul.f32 %v663, %v702
        %v710 = vmul.f32 %v666, %v702
        %v711 = vmul.f32 %v668, %v702
        %v712 = vmul.f32 %v671, %v702
        %v713 = vmul.f32 %v673, %v702
        %v714 = vmul.f32 %v676, %v702
        %v715 = vmul.f32 %v678, %v702
        %v716 = vmul.f32 %v681, %v702
        %v717 = vmul.f32 %v683, %v702
        %v718 = vmul.f32 %v686, %v702
        %v719 = vmul.f32 %v688, %v702
        %v720 = vmul.f32 %v691, %v702
        %v721 = vmul.f32 %v693, %v702
        %v722 = vmul.f32 %v696, %v702
        %v723 = vmul.f32 %v698, %v702
        %v724 = vld [vmem:[%s3] sm:$0x1]
        %v726 = vperm.slane %v724, 0
        %v728 = vadd.f32 %v704, %v726
        %v729 = vadd.f32 %v705, %v726
        %v730 = vadd.f32 %v706, %v726
        %v731 = vadd.f32 %v707, %v726
        %v732 = vadd.f32 %v708, %v726
        %v733 = vadd.f32 %v709, %v726
        %v734 = vadd.f32 %v710, %v726
        %v735 = vadd.f32 %v711, %v726
        %v736 = vadd.f32 %v712, %v726
        %v737 = vadd.f32 %v713, %v726
        %v738 = vadd.f32 %v714, %v726
        %v739 = vadd.f32 %v715, %v726
        %v740 = vadd.f32 %v716, %v726
        %v741 = vadd.f32 %v717, %v726
        %v742 = vadd.f32 %v718, %v726
        %v743 = vadd.f32 %v719, %v726
        %v744 = vadd.f32 %v720, %v726
        %v745 = vadd.f32 %v721, %v726
        %v746 = vadd.f32 %v722, %v726
        %v747 = vadd.f32 %v723, %v726
        %vm748 = vcmp.gt.f32.partialorder %v728, 0.0
        %vm749 = vcmp.gt.f32.partialorder %v729, 0.0
        %vm750 = vcmp.gt.f32.partialorder %v730, 0.0
        %vm751 = vcmp.gt.f32.partialorder %v731, 0.0
        %vm752 = vcmp.gt.f32.partialorder %v732, 0.0
        %vm753 = vcmp.gt.f32.partialorder %v733, 0.0
        %vm754 = vcmp.gt.f32.partialorder %v734, 0.0
        %vm755 = vcmp.gt.f32.partialorder %v735, 0.0
        %vm756 = vcmp.gt.f32.partialorder %v736, 0.0
        %vm757 = vcmp.gt.f32.partialorder %v737, 0.0
        %vm758 = vcmp.gt.f32.partialorder %v738, 0.0
        %vm759 = vcmp.gt.f32.partialorder %v739, 0.0
        %vm760 = vcmp.gt.f32.partialorder %v740, 0.0
        %vm761 = vcmp.gt.f32.partialorder %v741, 0.0
        %vm762 = vcmp.gt.f32.partialorder %v742, 0.0
        %vm763 = vcmp.gt.f32.partialorder %v743, 0.0
        %vm764 = vcmp.gt.f32.partialorder %v744, 0.0
        %vm765 = vcmp.gt.f32.partialorder %v745, 0.0
        %vm766 = vcmp.gt.f32.partialorder %v746, 0.0
        %vm767 = vcmp.gt.f32.partialorder %v747, 0.0
        %v768 = vmul.f32 %v728, 0.1
        %v769 = vmul.f32 %v729, 0.1
        %v770 = vmul.f32 %v730, 0.1
        %v771 = vmul.f32 %v731, 0.1
        %v772 = vmul.f32 %v732, 0.1
        %v773 = vmul.f32 %v733, 0.1
        %v774 = vmul.f32 %v734, 0.1
        %v775 = vmul.f32 %v735, 0.1
        %v776 = vmul.f32 %v736, 0.1
        %v777 = vmul.f32 %v737, 0.1
        %v778 = vmul.f32 %v738, 0.1
        %v779 = vmul.f32 %v739, 0.1
        %v780 = vmul.f32 %v740, 0.1
        %v781 = vmul.f32 %v741, 0.1
        %v782 = vmul.f32 %v742, 0.1
        %v783 = vmul.f32 %v743, 0.1
        %v784 = vmul.f32 %v744, 0.1
        %v785 = vmul.f32 %v745, 0.1
        %v786 = vmul.f32 %v746, 0.1
        %v787 = vmul.f32 %v747, 0.1
        %v788 = vsel %vm748, %v728, %v768
        %v789 = vsel %vm749, %v729, %v769
        %v790 = vsel %vm750, %v730, %v770
        %v791 = vsel %vm751, %v731, %v771
        %v792 = vsel %vm752, %v732, %v772
        %v793 = vsel %vm753, %v733, %v773
        %v794 = vsel %vm754, %v734, %v774
        %v795 = vsel %vm755, %v735, %v775
        %v796 = vsel %vm756, %v736, %v776
        %v797 = vsel %vm757, %v737, %v777
        %v798 = vsel %vm758, %v738, %v778
        %v799 = vsel %vm759, %v739, %v779
        %v800 = vsel %vm760, %v740, %v780
        %v801 = vsel %vm761, %v741, %v781
        %v802 = vsel %vm762, %v742, %v782
        %v803 = vsel %vm763, %v743, %v783
        %v804 = vsel %vm764, %v744, %v784
        %v805 = vsel %vm765, %v745, %v785
        %v806 = vsel %vm766, %v746, %v786
        %v807 = vsel %vm767, %v747, %v787
        %s808 = scalar_select %p455, 1, 0
        %v809 = vstv %s808
        %vm810 = vcmp.eq.s32.totalorder %v809, 1
        %v811 = vsel %vm810, %v788, 0.0
        %v812 = vsel %vm810, %v789, 0.0
        %s813 = scalar_select %p465, 1, 0
        %v814 = vstv %s813
        %vm815 = vcmp.eq.s32.totalorder %v814, 1
        %v816 = vsel %vm815, %v806, 0.0
        %v817 = vsel %vm815, %v807, 0.0
        %v818 = vpack.c.bf16 %v811, %v811
        %v819 = vpack.c.bf16 %v812, %v812
        %v820 = vpack.c.bf16 %v790, %v790
        %v821 = vpack.c.bf16 %v791, %v791
        %v822 = vpack.c.bf16 %v792, %v792
        %v823 = vpack.c.bf16 %v793, %v793
        %v824 = vpack.c.bf16 %v794, %v794
        %v825 = vpack.c.bf16 %v795, %v795
        %v826 = vpack.c.bf16 %v796, %v796
        %v827 = vpack.c.bf16 %v797, %v797
        %v828 = vpack.c.bf16 %v798, %v798
        %v829 = vpack.c.bf16 %v799, %v799
        %v830 = vpack.c.bf16 %v800, %v800
        %v831 = vpack.c.bf16 %v801, %v801
        %v832 = vpack.c.bf16 %v802, %v802
        %v833 = vpack.c.bf16 %v803, %v803
        %v834 = vpack.c.bf16 %v804, %v804
        %v835 = vpack.c.bf16 %v805, %v805
        %v836 = vpack.c.bf16 %v816, %v816
        %v837 = vpack.c.bf16 %v817, %v817
        %v858 = vunpack.c.l.b16 %v818
        %v859 = vunpack.c.l.b16 %v819
        %v860 = vunpack.c.l.b16 %v820
        %v861 = vunpack.c.l.b16 %v821
        %v862 = vunpack.c.l.b16 %v822
        %v863 = vunpack.c.l.b16 %v823
        %v864 = vunpack.c.l.b16 %v824
        %v865 = vunpack.c.l.b16 %v825
        %v866 = vunpack.c.l.b16 %v826
        %v867 = vunpack.c.l.b16 %v827
        %v868 = vunpack.c.l.b16 %v828
        %v869 = vunpack.c.l.b16 %v829
        %v870 = vunpack.c.l.b16 %v830
        %v871 = vunpack.c.l.b16 %v831
        %v872 = vunpack.c.l.b16 %v832
        %v873 = vunpack.c.l.b16 %v833
        %v874 = vunpack.c.l.b16 %v834
        %v875 = vunpack.c.l.b16 %v835
        %v876 = vunpack.c.l.b16 %v836
        %v877 = vunpack.c.l.b16 %v837
        %v878 = vpack.c.b16 %v859, %v858
        %v879 = vpack.c.b16 %v861, %v860
        %v880 = vpack.c.b16 %v863, %v862
        %v881 = vpack.c.b16 %v865, %v864
        %v882 = vpack.c.b16 %v867, %v866
        %v883 = vpack.c.b16 %v869, %v868
        %v884 = vpack.c.b16 %v871, %v870
        %v885 = vpack.c.b16 %v873, %v872
        %v886 = vpack.c.b16 %v875, %v874
        %v887 = vpack.c.b16 %v877, %v876
        %v889 = vshrl.u32 %v878, 16
        %v891 = vrot.slane %v889, 7
        %v892 = vshll.u32 %v878, 16
        %v894 = vor.u32 %v891, %v892
        %v896 = vshrl.u32 %v879, 16
        %v898 = vrot.slane %v896, 7
        %v899 = vshll.u32 %v879, 16
        %v901 = vor.u32 %v898, %v899
        %v903 = vshrl.u32 %v880, 16
        %v905 = vrot.slane %v903, 7
        %v906 = vshll.u32 %v880, 16
        %v908 = vor.u32 %v905, %v906
        %v910 = vshrl.u32 %v881, 16
        %v912 = vrot.slane %v910, 7
        %v913 = vshll.u32 %v881, 16
        %v915 = vor.u32 %v912, %v913
        %v917 = vshrl.u32 %v882, 16
        %v919 = vrot.slane %v917, 7
        %v920 = vshll.u32 %v882, 16
        %v922 = vor.u32 %v919, %v920
        %v924 = vshrl.u32 %v883, 16
        %v926 = vrot.slane %v924, 7
        %v927 = vshll.u32 %v883, 16
        %v929 = vor.u32 %v926, %v927
        %v931 = vshrl.u32 %v884, 16
        %v933 = vrot.slane %v931, 7
        %v934 = vshll.u32 %v884, 16
        %v936 = vor.u32 %v933, %v934
        %v938 = vshrl.u32 %v885, 16
        %v940 = vrot.slane %v938, 7
        %v941 = vshll.u32 %v885, 16
        %v943 = vor.u32 %v940, %v941
        %v945 = vshrl.u32 %v886, 16
        %v947 = vrot.slane %v945, 7
        %v948 = vshll.u32 %v886, 16
        %v950 = vor.u32 %v947, %v948
        %v952 = vshrl.u32 %v887, 16
        %v954 = vrot.slane %v952, 7
        %v955 = vshll.u32 %v887, 16
        %v957 = vor.u32 %v954, %v955
        %vm968 = vcmask 1040384
        %vm969 = vsmask.f32 256
        %vm970 = vmand %vm968, %vm969
        %v971 = vsel %vm970, 0, %v894
        %v972 = vsel %vm970, 0, %v901
        %v973 = vsel %vm970, 0, %v908
        %v974 = vsel %vm970, 0, %v915
        %v975 = vsel %vm970, 0, %v922
        %v976 = vsel %vm970, 0, %v929
        %v977 = vsel %vm970, 0, %v936
        %v978 = vsel %vm970, 0, %v943
        %v979 = vsel %vm970, 0, %v950
        %v980 = vsel %vm970, 0, %v957
        %v981 = vrot.slane %v892, 1
        %v982 = vor.u32 %v889, %v981
        %v983 = vrot.slane %v899, 1
        %v984 = vor.u32 %v896, %v983
        %v985 = vrot.slane %v906, 1
        %v986 = vor.u32 %v903, %v985
        %v987 = vrot.slane %v913, 1
        %v988 = vor.u32 %v910, %v987
        %v989 = vrot.slane %v920, 1
        %v990 = vor.u32 %v917, %v989
        %v991 = vrot.slane %v927, 1
        %v992 = vor.u32 %v924, %v991
        %v993 = vrot.slane %v934, 1
        %v994 = vor.u32 %v931, %v993
        %v995 = vrot.slane %v941, 1
        %v996 = vor.u32 %v938, %v995
        %v997 = vrot.slane %v948, 1
        %v998 = vor.u32 %v945, %v997
        %v999 = vrot.slane %v955, 1
        %v1000 = vor.u32 %v952, %v999
        %vm1011 = vcmask 1047552
        %vm1012 = vsmask.f32 7424
        %vm1013 = vmand %vm1011, %vm1012
        %v1014 = vsel %vm1013, %v982, 0
        %v1015 = vsel %vm1013, %v984, 0
        %v1016 = vsel %vm1013, %v986, 0
        %v1017 = vsel %vm1013, %v988, 0
        %v1018 = vsel %vm1013, %v990, 0
        %v1019 = vsel %vm1013, %v992, 0
        %v1020 = vsel %vm1013, %v994, 0
        %v1021 = vsel %vm1013, %v996, 0
        %v1022 = vsel %vm1013, %v998, 0
        %v1023 = vsel %vm1013, %v1000, 0
        %v1034 = vld [vmem:[#allocation7] sm:$0xf]
        %v1035 = vld [vmem:[#allocation7 + $0x4] sm:$0xf]
        %v1036 = vld [vmem:[#allocation7 + $0x8] sm:$0xf]
        %v1037 = vld [vmem:[#allocation7 + $0xc] sm:$0xf]
        %v1038 = vld [vmem:[#allocation7 + $0x10] sm:$0xf]
        %v1039 = vld [vmem:[#allocation7 + $0x14] sm:$0xf]
        %v1040 = vld [vmem:[#allocation7 + $0x18] sm:$0xf]
        %v1041 = vld [vmem:[#allocation7 + $0x1c] sm:$0xf]
        %v1042 = vld [vmem:[#allocation7 + $0x20] sm:$0xf]
        %v1043 = vld [vmem:[#allocation7 + $0x24] sm:$0xf]
        %v1044 = vld [vmem:[#allocation7 + $0x28] sm:$0xf]
        %v1045 = vld [vmem:[#allocation7 + $0x2c] sm:$0xf]
        %v1046 = vld [vmem:[#allocation7 + $0x30] sm:$0xf]
        %v1047 = vld [vmem:[#allocation7 + $0x34] sm:$0xf]
        %v1048 = vld [vmem:[#allocation7 + $0x38] sm:$0xf]
        %v1049 = vld [vmem:[#allocation7 + $0x3c] sm:$0xf]
        %v1050 = vld [vmem:[#allocation7 + $0x40] sm:$0xf]
        %v1051 = vld [vmem:[#allocation7 + $0x44] sm:$0xf]
        %v1052 = vld [vmem:[#allocation7 + $0x48] sm:$0xf]
        %v1053 = vld [vmem:[#allocation7 + $0x4c] sm:$0xf]
        %v1054 = vld [vmem:[#allocation7 + $0x50] sm:$0xf]
        %v1055 = vld [vmem:[#allocation7 + $0x54] sm:$0xf]
        %v1056 = vld [vmem:[#allocation7 + $0x58] sm:$0xf]
        %v1057 = vld [vmem:[#allocation7 + $0x5c] sm:$0xf]
        %v1058 = vld [vmem:[#allocation7 + $0x60] sm:$0xf]
        %v1059 = vld [vmem:[#allocation7 + $0x64] sm:$0xf]
        %v1060 = vld [vmem:[#allocation7 + $0x68] sm:$0xf]
        %v1061 = vld [vmem:[#allocation7 + $0x6c] sm:$0xf]
        %v1062 = vld [vmem:[#allocation7 + $0x70] sm:$0xf]
        %v1063 = vld [vmem:[#allocation7 + $0x74] sm:$0xf]
        %v1064 = vld [vmem:[#allocation7 + $0x78] sm:$0xf]
        %v1065 = vld [vmem:[#allocation7 + $0x7c] sm:$0xf]
        %v1066 = vld [vmem:[#allocation7 + $0x80] sm:$0xf]
        %v1067 = vld [vmem:[#allocation7 + $0x84] sm:$0xf]
        %v1068 = vld [vmem:[#allocation7 + $0x88] sm:$0xf]
        %v1069 = vld [vmem:[#allocation7 + $0x8c] sm:$0xf]
        %v1070 = vld [vmem:[#allocation7 + $0x90] sm:$0xf]
        %v1071 = vld [vmem:[#allocation7 + $0x94] sm:$0xf]
        %v1072 = vld [vmem:[#allocation7 + $0x98] sm:$0xf]
        %v1073 = vld [vmem:[#allocation7 + $0x9c] sm:$0xf]
        %v1074 = vld [vmem:[#allocation7 + $0xa0] sm:$0xf]
        %v1075 = vld [vmem:[#allocation7 + $0xa4] sm:$0xf]
        %v1076 = vld [vmem:[#allocation7 + $0xa8] sm:$0xf]
        %v1077 = vld [vmem:[#allocation7 + $0xac] sm:$0xf]
        %v1078 = vld [vmem:[#allocation7 + $0xb0] sm:$0xf]
        %v1079 = vld [vmem:[#allocation7 + $0xb4] sm:$0xf]
        %v1080 = vld [vmem:[#allocation7 + $0xb8] sm:$0xf]
        %v1081 = vld [vmem:[#allocation7 + $0xbc] sm:$0xf]
        %s1082 = scalar_lea.vmem [#allocation7], 192
        %v1083 = vld [vmem:[%s1082] sm:$0xf]
        %v1084 = vld [vmem:[%s1082 + $0x4] sm:$0xf]
        %v1085 = vld [vmem:[%s1082 + $0x8] sm:$0xf]
        %v1086 = vld [vmem:[%s1082 + $0xc] sm:$0xf]
        %v1087 = vld [vmem:[%s1082 + $0x10] sm:$0xf]
        %v1088 = vld [vmem:[%s1082 + $0x14] sm:$0xf]
        %v1089 = vld [vmem:[%s1082 + $0x18] sm:$0xf]
        %v1090 = vld [vmem:[%s1082 + $0x1c] sm:$0xf]
        %v1091 = vld [vmem:[%s1082 + $0x20] sm:$0xf]
        %v1092 = vld [vmem:[%s1082 + $0x24] sm:$0xf]
        %v1093 = vld [vmem:[%s1082 + $0x28] sm:$0xf]
        %v1094 = vld [vmem:[%s1082 + $0x2c] sm:$0xf]
        %v1095 = vld [vmem:[%s1082 + $0x30] sm:$0xf]
        %v1096 = vld [vmem:[%s1082 + $0x34] sm:$0xf]
        %v1097 = vld [vmem:[%s1082 + $0x38] sm:$0xf]
        %v1098 = vld [vmem:[%s1082 + $0x3c] sm:$0xf]
        %v1099 = vld [vmem:[%s1082 + $0x40] sm:$0xf]
        %v1100 = vld [vmem:[%s1082 + $0x44] sm:$0xf]
        %v1101 = vld [vmem:[%s1082 + $0x48] sm:$0xf]
        %v1102 = vld [vmem:[%s1082 + $0x4c] sm:$0xf]
        %v1103 = vld [vmem:[%s1082 + $0x50] sm:$0xf]
        %v1104 = vld [vmem:[%s1082 + $0x54] sm:$0xf]
        %v1105 = vld [vmem:[%s1082 + $0x58] sm:$0xf]
        %v1106 = vld [vmem:[%s1082 + $0x5c] sm:$0xf]
        %v1107 = vld [vmem:[%s1082 + $0x60] sm:$0xf]
        %v1108 = vld [vmem:[%s1082 + $0x64] sm:$0xf]
        %v1109 = vld [vmem:[%s1082 + $0x68] sm:$0xf]
        %v1110 = vld [vmem:[%s1082 + $0x6c] sm:$0xf]
        %v1111 = vld [vmem:[%s1082 + $0x70] sm:$0xf]
        %v1112 = vld [vmem:[%s1082 + $0x74] sm:$0xf]
        %v1113 = vld [vmem:[%s1082 + $0x78] sm:$0xf]
        %v1114 = vld [vmem:[%s1082 + $0x7c] sm:$0xf]
        %v1115 = vld [vmem:[%s1082 + $0x80] sm:$0xf]
        %v1116 = vld [vmem:[%s1082 + $0x84] sm:$0xf]
        %v1117 = vld [vmem:[%s1082 + $0x88] sm:$0xf]
        %v1118 = vld [vmem:[%s1082 + $0x8c] sm:$0xf]
        %v1119 = vld [vmem:[%s1082 + $0x90] sm:$0xf]
        %v1120 = vld [vmem:[%s1082 + $0x94] sm:$0xf]
        %v1121 = vld [vmem:[%s1082 + $0x98] sm:$0xf]
        %v1122 = vld [vmem:[%s1082 + $0x9c] sm:$0xf]
        %v1123 = vld [vmem:[%s1082 + $0xa0] sm:$0xf]
        %v1124 = vld [vmem:[%s1082 + $0xa4] sm:$0xf]
        %v1125 = vld [vmem:[%s1082 + $0xa8] sm:$0xf]
        %v1126 = vld [vmem:[%s1082 + $0xac] sm:$0xf]
        %v1127 = vld [vmem:[%s1082 + $0xb0] sm:$0xf]
        %v1128 = vld [vmem:[%s1082 + $0xb4] sm:$0xf]
        %v1129 = vld [vmem:[%s1082 + $0xb8] sm:$0xf]
        %v1130 = vld [vmem:[%s1082 + $0xbc] sm:$0xf]
        %v1179 = vunpack.c.l.b16 %v1083
        %v1180 = vunpack.c.l.b16 %v1084
        %v1181 = vunpack.c.l.b16 %v1085
        %v1182 = vunpack.c.l.b16 %v1086
        %v1183 = vunpack.c.l.b16 %v1087
        %v1184 = vunpack.c.l.b16 %v1088
        %v1185 = vunpack.c.l.b16 %v1089
        %v1186 = vunpack.c.l.b16 %v1090
        %v1187 = vunpack.c.l.b16 %v1091
        %v1188 = vunpack.c.l.b16 %v1092
        %v1189 = vunpack.c.l.b16 %v1093
        %v1190 = vunpack.c.l.b16 %v1094
        %v1191 = vunpack.c.l.b16 %v1095
        %v1192 = vunpack.c.l.b16 %v1096
        %v1193 = vunpack.c.l.b16 %v1097
        %v1194 = vunpack.c.l.b16 %v1098
        %v1195 = vunpack.c.l.b16 %v1099
        %v1196 = vunpack.c.l.b16 %v1100
        %v1197 = vunpack.c.l.b16 %v1101
        %v1198 = vunpack.c.l.b16 %v1102
        %v1199 = vunpack.c.l.b16 %v1103
        %v1200 = vunpack.c.l.b16 %v1104
        %v1201 = vunpack.c.l.b16 %v1105
        %v1202 = vunpack.c.l.b16 %v1106
        %v1203 = vunpack.c.l.b16 %v1107
        %v1204 = vunpack.c.l.b16 %v1108
        %v1205 = vunpack.c.l.b16 %v1109
        %v1206 = vunpack.c.l.b16 %v1110
        %v1207 = vunpack.c.l.b16 %v1111
        %v1208 = vunpack.c.l.b16 %v1112
        %v1209 = vunpack.c.l.b16 %v1113
        %v1210 = vunpack.c.l.b16 %v1114
        %v1211 = vunpack.c.l.b16 %v1115
        %v1212 = vunpack.c.l.b16 %v1116
        %v1213 = vunpack.c.l.b16 %v1117
        %v1214 = vunpack.c.l.b16 %v1118
        %v1215 = vunpack.c.l.b16 %v1119
        %v1216 = vunpack.c.l.b16 %v1120
        %v1217 = vunpack.c.l.b16 %v1121
        %v1218 = vunpack.c.l.b16 %v1122
        %v1219 = vunpack.c.l.b16 %v1123
        %v1220 = vunpack.c.l.b16 %v1124
        %v1221 = vunpack.c.l.b16 %v1125
        %v1222 = vunpack.c.l.b16 %v1126
        %v1223 = vunpack.c.l.b16 %v1127
        %v1224 = vunpack.c.l.b16 %v1128
        %v1225 = vunpack.c.l.b16 %v1129
        %v1226 = vunpack.c.l.b16 %v1130
        %v1227 = vpack.c.b16 %v1180, %v1179
        %v1228 = vpack.c.b16 %v1182, %v1181
        %v1229 = vpack.c.b16 %v1184, %v1183
        %v1230 = vpack.c.b16 %v1186, %v1185
        %v1231 = vpack.c.b16 %v1188, %v1187
        %v1232 = vpack.c.b16 %v1190, %v1189
        %v1233 = vpack.c.b16 %v1192, %v1191
        %v1234 = vpack.c.b16 %v1194, %v1193
        %v1235 = vpack.c.b16 %v1196, %v1195
        %v1236 = vpack.c.b16 %v1198, %v1197
        %v1237 = vpack.c.b16 %v1200, %v1199
        %v1238 = vpack.c.b16 %v1202, %v1201
        %v1239 = vpack.c.b16 %v1204, %v1203
        %v1240 = vpack.c.b16 %v1206, %v1205
        %v1241 = vpack.c.b16 %v1208, %v1207
        %v1242 = vpack.c.b16 %v1210, %v1209
        %v1243 = vpack.c.b16 %v1212, %v1211
        %v1244 = vpack.c.b16 %v1214, %v1213
        %v1245 = vpack.c.b16 %v1216, %v1215
        %v1246 = vpack.c.b16 %v1218, %v1217
        %v1247 = vpack.c.b16 %v1220, %v1219
        %v1248 = vpack.c.b16 %v1222, %v1221
        %v1249 = vpack.c.b16 %v1224, %v1223
        %v1250 = vpack.c.b16 %v1226, %v1225
        %1275 = vmatpush.bf16.msra.mxu0 %v1234
        %1276 = vmatpush.bf16.msra.mxu0 %v1233
        %1277 = vmatpush.bf16.msra.mxu0 %v1232
        %1278 = vmatpush.bf16.msra.mxu0 %v1231
        %1279 = vmatpush.bf16.msra.mxu0 %v1230
        %1280 = vmatpush.bf16.msra.mxu0 %v1229
        %1281 = vmatpush.bf16.msra.mxu0 %v1228
        %1282 = vmatpush.bf16.msra.mxu0 %v1227
        %1283 = vmatmul.bf16.gmra.mxu0 %v972
        %v1284 = vpop.f32.mrf.mxu0
        %v1285 = vadd.f32 0.0, %v1284
        %v1286 = vpop.f32.mrf.mxu0
        %v1287 = vadd.f32 0.0, %v1286
        %1288 = vmatmul.bf16.gmra.mxu0 %v973
        %v1289 = vpop.f32.mrf.mxu0
        %v1290 = vadd.f32 0.0, %v1289
        %v1291 = vpop.f32.mrf.mxu0
        %v1292 = vadd.f32 0.0, %v1291
        %1293 = vmatmul.bf16.gmra.mxu0 %v974
        %v1294 = vpop.f32.mrf.mxu0
        %v1295 = vadd.f32 0.0, %v1294
        %v1296 = vpop.f32.mrf.mxu0
        %v1297 = vadd.f32 0.0, %v1296
        %1298 = vmatmul.bf16.gmra.mxu0 %v975
        %v1299 = vpop.f32.mrf.mxu0
        %v1300 = vadd.f32 0.0, %v1299
        %v1301 = vpop.f32.mrf.mxu0
        %v1302 = vadd.f32 0.0, %v1301
        %1303 = vmatmul.bf16.gmra.mxu0 %v976
        %v1304 = vpop.f32.mrf.mxu0
        %v1305 = vadd.f32 0.0, %v1304
        %v1306 = vpop.f32.mrf.mxu0
        %v1307 = vadd.f32 0.0, %v1306
        %1308 = vmatmul.bf16.gmra.mxu0 %v977
        %v1309 = vpop.f32.mrf.mxu0
        %v1310 = vadd.f32 0.0, %v1309
        %v1311 = vpop.f32.mrf.mxu0
        %v1312 = vadd.f32 0.0, %v1311
        %1313 = vmatmul.bf16.gmra.mxu0 %v978
        %v1314 = vpop.f32.mrf.mxu0
        %v1315 = vadd.f32 0.0, %v1314
        %v1316 = vpop.f32.mrf.mxu0
        %v1317 = vadd.f32 0.0, %v1316
        %1318 = vmatmul.bf16.gmra.mxu0 %v979
        %v1319 = vpop.f32.mrf.mxu0
        %v1320 = vadd.f32 0.0, %v1319
        %v1321 = vpop.f32.mrf.mxu0
        %v1322 = vadd.f32 0.0, %v1321
        %1323 = vdwg.mxu0
        %1324 = vmatpush.bf16.msra.mxu0 %v1242
        %1325 = vmatpush.bf16.msra.mxu0 %v1241
        %1326 = vmatpush.bf16.msra.mxu0 %v1240
        %1327 = vmatpush.bf16.msra.mxu0 %v1239
        %1328 = vmatpush.bf16.msra.mxu0 %v1238
        %1329 = vmatpush.bf16.msra.mxu0 %v1237
        %1330 = vmatpush.bf16.msra.mxu0 %v1236
        %1331 = vmatpush.bf16.msra.mxu0 %v1235
        %1332 = vmatmul.bf16.gmra.mxu0 %v879
        %v1333 = vpop.f32.mrf.mxu0
        %v1334 = vadd.f32 %v1285, %v1333
        %v1335 = vpop.f32.mrf.mxu0
        %v1336 = vadd.f32 %v1287, %v1335
        %1337 = vmatmul.bf16.gmra.mxu0 %v880
        %v1338 = vpop.f32.mrf.mxu0
        %v1339 = vadd.f32 %v1290, %v1338
        %v1340 = vpop.f32.mrf.mxu0
        %v1341 = vadd.f32 %v1292, %v1340
        %1342 = vmatmul.bf16.gmra.mxu0 %v881
        %v1343 = vpop.f32.mrf.mxu0
        %v1344 = vadd.f32 %v1295, %v1343
        %v1345 = vpop.f32.mrf.mxu0
        %v1346 = vadd.f32 %v1297, %v1345
        %1347 = vmatmul.bf16.gmra.mxu0 %v882
        %v1348 = vpop.f32.mrf.mxu0
        %v1349 = vadd.f32 %v1300, %v1348
        %v1350 = vpop.f32.mrf.mxu0
        %v1351 = vadd.f32 %v1302, %v1350
        %1352 = vmatmul.bf16.gmra.mxu0 %v883
        %v1353 = vpop.f32.mrf.mxu0
        %v1354 = vadd.f32 %v1305, %v1353
        %v1355 = vpop.f32.mrf.mxu0
        %v1356 = vadd.f32 %v1307, %v1355
        %1357 = vmatmul.bf16.gmra.mxu0 %v884
        %v1358 = vpop.f32.mrf.mxu0
        %v1359 = vadd.f32 %v1310, %v1358
        %v1360 = vpop.f32.mrf.mxu0
        %v1361 = vadd.f32 %v1312, %v1360
        %1362 = vmatmul.bf16.gmra.mxu0 %v885
        %v1363 = vpop.f32.mrf.mxu0
        %v1364 = vadd.f32 %v1315, %v1363
        %v1365 = vpop.f32.mrf.mxu0
        %v1366 = vadd.f32 %v1317, %v1365
        %1367 = vmatmul.bf16.gmra.mxu0 %v886
        %v1368 = vpop.f32.mrf.mxu0
        %v1369 = vadd.f32 %v1320, %v1368
        %v1370 = vpop.f32.mrf.mxu0
        %v1371 = vadd.f32 %v1322, %v1370
        %1372 = vdwg.mxu0
        %1373 = vmatpush.bf16.msra.mxu0 %v1250
        %1374 = vmatpush.bf16.msra.mxu0 %v1249
        %1375 = vmatpush.bf16.msra.mxu0 %v1248
        %1376 = vmatpush.bf16.msra.mxu0 %v1247
        %1377 = vmatpush.bf16.msra.mxu0 %v1246
        %1378 = vmatpush.bf16.msra.mxu0 %v1245
        %1379 = vmatpush.bf16.msra.mxu0 %v1244
        %1380 = vmatpush.bf16.msra.mxu0 %v1243
        %1381 = vmatmul.bf16.gmra.mxu0 %v1015
        %v1382 = vpop.f32.mrf.mxu0
        %v1383 = vadd.f32 %v1334, %v1382
        %v1384 = vpop.f32.mrf.mxu0
        %v1385 = vadd.f32 %v1336, %v1384
        %1386 = vmatmul.bf16.gmra.mxu0 %v1016
        %v1387 = vpop.f32.mrf.mxu0
        %v1388 = vadd.f32 %v1339, %v1387
        %v1389 = vpop.f32.mrf.mxu0
        %v1390 = vadd.f32 %v1341, %v1389
        %1391 = vmatmul.bf16.gmra.mxu0 %v1017
        %v1392 = vpop.f32.mrf.mxu0
        %v1393 = vadd.f32 %v1344, %v1392
        %v1394 = vpop.f32.mrf.mxu0
        %v1395 = vadd.f32 %v1346, %v1394
        %1396 = vmatmul.bf16.gmra.mxu0 %v1018
        %v1397 = vpop.f32.mrf.mxu0
        %v1398 = vadd.f32 %v1349, %v1397
        %v1399 = vpop.f32.mrf.mxu0
        %v1400 = vadd.f32 %v1351, %v1399
        %1401 = vmatmul.bf16.gmra.mxu0 %v1019
        %v1402 = vpop.f32.mrf.mxu0
        %v1403 = vadd.f32 %v1354, %v1402
        %v1404 = vpop.f32.mrf.mxu0
        %v1405 = vadd.f32 %v1356, %v1404
        %1406 = vmatmul.bf16.gmra.mxu0 %v1020
        %v1407 = vpop.f32.mrf.mxu0
        %v1408 = vadd.f32 %v1359, %v1407
        %v1409 = vpop.f32.mrf.mxu0
        %v1410 = vadd.f32 %v1361, %v1409
        %1411 = vmatmul.bf16.gmra.mxu0 %v1021
        %v1412 = vpop.f32.mrf.mxu0
        %v1413 = vadd.f32 %v1364, %v1412
        %v1414 = vpop.f32.mrf.mxu0
        %v1415 = vadd.f32 %v1366, %v1414
        %1416 = vmatmul.bf16.gmra.mxu0 %v1022
        %v1417 = vpop.f32.mrf.mxu0
        %v1418 = vadd.f32 %v1369, %v1417
        %v1419 = vpop.f32.mrf.mxu0
        %v1420 = vadd.f32 %v1371, %v1419
        %1421 = vdwg.mxu0
        %v1470 = vunpack.c.l.b16 %v1034
        %v1471 = vunpack.c.l.b16 %v1035
        %v1472 = vunpack.c.l.b16 %v1036
        %v1473 = vunpack.c.l.b16 %v1037
        %v1474 = vunpack.c.l.b16 %v1038
        %v1475 = vunpack.c.l.b16 %v1039
        %v1476 = vunpack.c.l.b16 %v1040
        %v1477 = vunpack.c.l.b16 %v1041
        %v1478 = vunpack.c.l.b16 %v1042
        %v1479 = vunpack.c.l.b16 %v1043
        %v1480 = vunpack.c.l.b16 %v1044
        %v1481 = vunpack.c.l.b16 %v1045
        %v1482 = vunpack.c.l.b16 %v1046
        %v1483 = vunpack.c.l.b16 %v1047
        %v1484 = vunpack.c.l.b16 %v1048
        %v1485 = vunpack.c.l.b16 %v1049
        %v1486 = vunpack.c.l.b16 %v1050
        %v1487 = vunpack.c.l.b16 %v1051
        %v1488 = vunpack.c.l.b16 %v1052
        %v1489 = vunpack.c.l.b16 %v1053
        %v1490 = vunpack.c.l.b16 %v1054
        %v1491 = vunpack.c.l.b16 %v1055
        %v1492 = vunpack.c.l.b16 %v1056
        %v1493 = vunpack.c.l.b16 %v1057
        %v1494 = vunpack.c.l.b16 %v1058
        %v1495 = vunpack.c.l.b16 %v1059
        %v1496 = vunpack.c.l.b16 %v1060
        %v1497 = vunpack.c.l.b16 %v1061
        %v1498 = vunpack.c.l.b16 %v1062
        %v1499 = vunpack.c.l.b16 %v1063
        %v1500 = vunpack.c.l.b16 %v1064
        %v1501 = vunpack.c.l.b16 %v1065
        %v1502 = vunpack.c.l.b16 %v1066
        %v1503 = vunpack.c.l.b16 %v1067
        %v1504 = vunpack.c.l.b16 %v1068
        %v1505 = vunpack.c.l.b16 %v1069
        %v1506 = vunpack.c.l.b16 %v1070
        %v1507 = vunpack.c.l.b16 %v1071
        %v1508 = vunpack.c.l.b16 %v1072
        %v1509 = vunpack.c.l.b16 %v1073
        %v1510 = vunpack.c.l.b16 %v1074
        %v1511 = vunpack.c.l.b16 %v1075
        %v1512 = vunpack.c.l.b16 %v1076
        %v1513 = vunpack.c.l.b16 %v1077
        %v1514 = vunpack.c.l.b16 %v1078
        %v1515 = vunpack.c.l.b16 %v1079
        %v1516 = vunpack.c.l.b16 %v1080
        %v1517 = vunpack.c.l.b16 %v1081
        %v1518 = vpack.c.b16 %v1471, %v1470
        %v1519 = vpack.c.b16 %v1473, %v1472
        %v1520 = vpack.c.b16 %v1475, %v1474
        %v1521 = vpack.c.b16 %v1477, %v1476
        %v1522 = vpack.c.b16 %v1479, %v1478
        %v1523 = vpack.c.b16 %v1481, %v1480
        %v1524 = vpack.c.b16 %v1483, %v1482
        %v1525 = vpack.c.b16 %v1485, %v1484
        %v1526 = vpack.c.b16 %v1487, %v1486
        %v1527 = vpack.c.b16 %v1489, %v1488
        %v1528 = vpack.c.b16 %v1491, %v1490
        %v1529 = vpack.c.b16 %v1493, %v1492
        %v1530 = vpack.c.b16 %v1495, %v1494
        %v1531 = vpack.c.b16 %v1497, %v1496
        %v1532 = vpack.c.b16 %v1499, %v1498
        %v1533 = vpack.c.b16 %v1501, %v1500
        %v1534 = vpack.c.b16 %v1503, %v1502
        %v1535 = vpack.c.b16 %v1505, %v1504
        %v1536 = vpack.c.b16 %v1507, %v1506
        %v1537 = vpack.c.b16 %v1509, %v1508
        %v1538 = vpack.c.b16 %v1511, %v1510
        %v1539 = vpack.c.b16 %v1513, %v1512
        %v1540 = vpack.c.b16 %v1515, %v1514
        %v1541 = vpack.c.b16 %v1517, %v1516
        %1566 = vmatpush.bf16.msra.mxu0 %v1525
        %1567 = vmatpush.bf16.msra.mxu0 %v1524
        %1568 = vmatpush.bf16.msra.mxu0 %v1523
        %1569 = vmatpush.bf16.msra.mxu0 %v1522
        %1570 = vmatpush.bf16.msra.mxu0 %v1521
        %1571 = vmatpush.bf16.msra.mxu0 %v1520
        %1572 = vmatpush.bf16.msra.mxu0 %v1519
        %1573 = vmatpush.bf16.msra.mxu0 %v1518
        %1574 = vmatmul.bf16.gmra.mxu0 %v971
        %v1575 = vpop.f32.mrf.mxu0
        %v1576 = vadd.f32 %v1383, %v1575
        %v1577 = vpop.f32.mrf.mxu0
        %v1578 = vadd.f32 %v1385, %v1577
        %1579 = vmatmul.bf16.gmra.mxu0 %v972
        %v1580 = vpop.f32.mrf.mxu0
        %v1581 = vadd.f32 %v1388, %v1580
        %v1582 = vpop.f32.mrf.mxu0
        %v1583 = vadd.f32 %v1390, %v1582
        %1584 = vmatmul.bf16.gmra.mxu0 %v973
        %v1585 = vpop.f32.mrf.mxu0
        %v1586 = vadd.f32 %v1393, %v1585
        %v1587 = vpop.f32.mrf.mxu0
        %v1588 = vadd.f32 %v1395, %v1587
        %1589 = vmatmul.bf16.gmra.mxu0 %v974
        %v1590 = vpop.f32.mrf.mxu0
        %v1591 = vadd.f32 %v1398, %v1590
        %v1592 = vpop.f32.mrf.mxu0
        %v1593 = vadd.f32 %v1400, %v1592
        %1594 = vmatmul.bf16.gmra.mxu0 %v975
        %v1595 = vpop.f32.mrf.mxu0
        %v1596 = vadd.f32 %v1403, %v1595
        %v1597 = vpop.f32.mrf.mxu0
        %v1598 = vadd.f32 %v1405, %v1597
        %1599 = vmatmul.bf16.gmra.mxu0 %v976
        %v1600 = vpop.f32.mrf.mxu0
        %v1601 = vadd.f32 %v1408, %v1600
        %v1602 = vpop.f32.mrf.mxu0
        %v1603 = vadd.f32 %v1410, %v1602
        %1604 = vmatmul.bf16.gmra.mxu0 %v977
        %v1605 = vpop.f32.mrf.mxu0
        %v1606 = vadd.f32 %v1413, %v1605
        %v1607 = vpop.f32.mrf.mxu0
        %v1608 = vadd.f32 %v1415, %v1607
        %1609 = vmatmul.bf16.gmra.mxu0 %v978
        %v1610 = vpop.f32.mrf.mxu0
        %v1611 = vadd.f32 %v1418, %v1610
        %v1612 = vpop.f32.mrf.mxu0
        %v1613 = vadd.f32 %v1420, %v1612
        %1614 = vdwg.mxu0
        %1615 = vmatpush.bf16.msra.mxu0 %v1533
        %1616 = vmatpush.bf16.msra.mxu0 %v1532
        %1617 = vmatpush.bf16.msra.mxu0 %v1531
        %1618 = vmatpush.bf16.msra.mxu0 %v1530
        %1619 = vmatpush.bf16.msra.mxu0 %v1529
        %1620 = vmatpush.bf16.msra.mxu0 %v1528
        %1621 = vmatpush.bf16.msra.mxu0 %v1527
        %1622 = vmatpush.bf16.msra.mxu0 %v1526
        %1623 = vmatmul.bf16.gmra.mxu0 %v878
        %v1624 = vpop.f32.mrf.mxu0
        %v1625 = vadd.f32 %v1576, %v1624
        %v1626 = vpop.f32.mrf.mxu0
        %v1627 = vadd.f32 %v1578, %v1626
        %1628 = vmatmul.bf16.gmra.mxu0 %v879
        %v1629 = vpop.f32.mrf.mxu0
        %v1630 = vadd.f32 %v1581, %v1629
        %v1631 = vpop.f32.mrf.mxu0
        %v1632 = vadd.f32 %v1583, %v1631
        %1633 = vmatmul.bf16.gmra.mxu0 %v880
        %v1634 = vpop.f32.mrf.mxu0
        %v1635 = vadd.f32 %v1586, %v1634
        %v1636 = vpop.f32.mrf.mxu0
        %v1637 = vadd.f32 %v1588, %v1636
        %1638 = vmatmul.bf16.gmra.mxu0 %v881
        %v1639 = vpop.f32.mrf.mxu0
        %v1640 = vadd.f32 %v1591, %v1639
        %v1641 = vpop.f32.mrf.mxu0
        %v1642 = vadd.f32 %v1593, %v1641
        %1643 = vmatmul.bf16.gmra.mxu0 %v882
        %v1644 = vpop.f32.mrf.mxu0
        %v1645 = vadd.f32 %v1596, %v1644
        %v1646 = vpop.f32.mrf.mxu0
        %v1647 = vadd.f32 %v1598, %v1646
        %1648 = vmatmul.bf16.gmra.mxu0 %v883
        %v1649 = vpop.f32.mrf.mxu0
        %v1650 = vadd.f32 %v1601, %v1649
        %v1651 = vpop.f32.mrf.mxu0
        %v1652 = vadd.f32 %v1603, %v1651
        %1653 = vmatmul.bf16.gmra.mxu0 %v884
        %v1654 = vpop.f32.mrf.mxu0
        %v1655 = vadd.f32 %v1606, %v1654
        %v1656 = vpop.f32.mrf.mxu0
        %v1657 = vadd.f32 %v1608, %v1656
        %1658 = vmatmul.bf16.gmra.mxu0 %v885
        %v1659 = vpop.f32.mrf.mxu0
        %v1660 = vadd.f32 %v1611, %v1659
        %v1661 = vpop.f32.mrf.mxu0
        %v1662 = vadd.f32 %v1613, %v1661
        %1663 = vdwg.mxu0
        %1664 = vmatpush.bf16.msra.mxu0 %v1541
        %1665 = vmatpush.bf16.msra.mxu0 %v1540
        %1666 = vmatpush.bf16.msra.mxu0 %v1539
        %1667 = vmatpush.bf16.msra.mxu0 %v1538
        %1668 = vmatpush.bf16.msra.mxu0 %v1537
        %1669 = vmatpush.bf16.msra.mxu0 %v1536
        %1670 = vmatpush.bf16.msra.mxu0 %v1535
        %1671 = vmatpush.bf16.msra.mxu0 %v1534
        %1672 = vmatmul.bf16.gmra.mxu0 %v1014
        %v1673 = vpop.f32.mrf.mxu0
        %v1674 = vadd.f32 %v1625, %v1673
        %v1675 = vpop.f32.mrf.mxu0
        %v1676 = vadd.f32 %v1627, %v1675
        %1677 = vmatmul.bf16.gmra.mxu0 %v1015
        %v1678 = vpop.f32.mrf.mxu0
        %v1679 = vadd.f32 %v1630, %v1678
        %v1680 = vpop.f32.mrf.mxu0
        %v1681 = vadd.f32 %v1632, %v1680
        %1682 = vmatmul.bf16.gmra.mxu0 %v1016
        %v1683 = vpop.f32.mrf.mxu0
        %v1684 = vadd.f32 %v1635, %v1683
        %v1685 = vpop.f32.mrf.mxu0
        %v1686 = vadd.f32 %v1637, %v1685
        %1687 = vmatmul.bf16.gmra.mxu0 %v1017
        %v1688 = vpop.f32.mrf.mxu0
        %v1689 = vadd.f32 %v1640, %v1688
        %v1690 = vpop.f32.mrf.mxu0
        %v1691 = vadd.f32 %v1642, %v1690
        %1692 = vmatmul.bf16.gmra.mxu0 %v1018
        %v1693 = vpop.f32.mrf.mxu0
        %v1694 = vadd.f32 %v1645, %v1693
        %v1695 = vpop.f32.mrf.mxu0
        %v1696 = vadd.f32 %v1647, %v1695
        %1697 = vmatmul.bf16.gmra.mxu0 %v1019
        %v1698 = vpop.f32.mrf.mxu0
        %v1699 = vadd.f32 %v1650, %v1698
        %v1700 = vpop.f32.mrf.mxu0
        %v1701 = vadd.f32 %v1652, %v1700
        %1702 = vmatmul.bf16.gmra.mxu0 %v1020
        %v1703 = vpop.f32.mrf.mxu0
        %v1704 = vadd.f32 %v1655, %v1703
        %v1705 = vpop.f32.mrf.mxu0
        %v1706 = vadd.f32 %v1657, %v1705
        %1707 = vmatmul.bf16.gmra.mxu0 %v1021
        %v1708 = vpop.f32.mrf.mxu0
        %v1709 = vadd.f32 %v1660, %v1708
        %v1710 = vpop.f32.mrf.mxu0
        %v1711 = vadd.f32 %v1662, %v1710
        %1712 = vdwg.mxu0
        %s1713 = scalar_lea.vmem [#allocation7], 384
        %v1714 = vld [vmem:[%s1713] sm:$0xf]
        %v1715 = vld [vmem:[%s1713 + $0x4] sm:$0xf]
        %v1716 = vld [vmem:[%s1713 + $0x8] sm:$0xf]
        %v1717 = vld [vmem:[%s1713 + $0xc] sm:$0xf]
        %v1718 = vld [vmem:[%s1713 + $0x10] sm:$0xf]
        %v1719 = vld [vmem:[%s1713 + $0x14] sm:$0xf]
        %v1720 = vld [vmem:[%s1713 + $0x18] sm:$0xf]
        %v1721 = vld [vmem:[%s1713 + $0x1c] sm:$0xf]
        %v1722 = vld [vmem:[%s1713 + $0x20] sm:$0xf]
        %v1723 = vld [vmem:[%s1713 + $0x24] sm:$0xf]
        %v1724 = vld [vmem:[%s1713 + $0x28] sm:$0xf]
        %v1725 = vld [vmem:[%s1713 + $0x2c] sm:$0xf]
        %v1726 = vld [vmem:[%s1713 + $0x30] sm:$0xf]
        %v1727 = vld [vmem:[%s1713 + $0x34] sm:$0xf]
        %v1728 = vld [vmem:[%s1713 + $0x38] sm:$0xf]
        %v1729 = vld [vmem:[%s1713 + $0x3c] sm:$0xf]
        %v1730 = vld [vmem:[%s1713 + $0x40] sm:$0xf]
        %v1731 = vld [vmem:[%s1713 + $0x44] sm:$0xf]
        %v1732 = vld [vmem:[%s1713 + $0x48] sm:$0xf]
        %v1733 = vld [vmem:[%s1713 + $0x4c] sm:$0xf]
        %v1734 = vld [vmem:[%s1713 + $0x50] sm:$0xf]
        %v1735 = vld [vmem:[%s1713 + $0x54] sm:$0xf]
        %v1736 = vld [vmem:[%s1713 + $0x58] sm:$0xf]
        %v1737 = vld [vmem:[%s1713 + $0x5c] sm:$0xf]
        %v1738 = vld [vmem:[%s1713 + $0x60] sm:$0xf]
        %v1739 = vld [vmem:[%s1713 + $0x64] sm:$0xf]
        %v1740 = vld [vmem:[%s1713 + $0x68] sm:$0xf]
        %v1741 = vld [vmem:[%s1713 + $0x6c] sm:$0xf]
        %v1742 = vld [vmem:[%s1713 + $0x70] sm:$0xf]
        %v1743 = vld [vmem:[%s1713 + $0x74] sm:$0xf]
        %v1744 = vld [vmem:[%s1713 + $0x78] sm:$0xf]
        %v1745 = vld [vmem:[%s1713 + $0x7c] sm:$0xf]
        %v1746 = vld [vmem:[%s1713 + $0x80] sm:$0xf]
        %v1747 = vld [vmem:[%s1713 + $0x84] sm:$0xf]
        %v1748 = vld [vmem:[%s1713 + $0x88] sm:$0xf]
        %v1749 = vld [vmem:[%s1713 + $0x8c] sm:$0xf]
        %v1750 = vld [vmem:[%s1713 + $0x90] sm:$0xf]
        %v1751 = vld [vmem:[%s1713 + $0x94] sm:$0xf]
        %v1752 = vld [vmem:[%s1713 + $0x98] sm:$0xf]
        %v1753 = vld [vmem:[%s1713 + $0x9c] sm:$0xf]
        %v1754 = vld [vmem:[%s1713 + $0xa0] sm:$0xf]
        %v1755 = vld [vmem:[%s1713 + $0xa4] sm:$0xf]
        %v1756 = vld [vmem:[%s1713 + $0xa8] sm:$0xf]
        %v1757 = vld [vmem:[%s1713 + $0xac] sm:$0xf]
        %v1758 = vld [vmem:[%s1713 + $0xb0] sm:$0xf]
        %v1759 = vld [vmem:[%s1713 + $0xb4] sm:$0xf]
        %v1760 = vld [vmem:[%s1713 + $0xb8] sm:$0xf]
        %v1761 = vld [vmem:[%s1713 + $0xbc] sm:$0xf]
        %v1810 = vunpack.c.l.b16 %v1714
        %v1811 = vunpack.c.l.b16 %v1715
        %v1812 = vunpack.c.l.b16 %v1716
        %v1813 = vunpack.c.l.b16 %v1717
        %v1814 = vunpack.c.l.b16 %v1718
        %v1815 = vunpack.c.l.b16 %v1719
        %v1816 = vunpack.c.l.b16 %v1720
        %v1817 = vunpack.c.l.b16 %v1721
        %v1818 = vunpack.c.l.b16 %v1722
        %v1819 = vunpack.c.l.b16 %v1723
        %v1820 = vunpack.c.l.b16 %v1724
        %v1821 = vunpack.c.l.b16 %v1725
        %v1822 = vunpack.c.l.b16 %v1726
        %v1823 = vunpack.c.l.b16 %v1727
        %v1824 = vunpack.c.l.b16 %v1728
        %v1825 = vunpack.c.l.b16 %v1729
        %v1826 = vunpack.c.l.b16 %v1730
        %v1827 = vunpack.c.l.b16 %v1731
        %v1828 = vunpack.c.l.b16 %v1732
        %v1829 = vunpack.c.l.b16 %v1733
        %v1830 = vunpack.c.l.b16 %v1734
        %v1831 = vunpack.c.l.b16 %v1735
        %v1832 = vunpack.c.l.b16 %v1736
        %v1833 = vunpack.c.l.b16 %v1737
        %v1834 = vunpack.c.l.b16 %v1738
        %v1835 = vunpack.c.l.b16 %v1739
        %v1836 = vunpack.c.l.b16 %v1740
        %v1837 = vunpack.c.l.b16 %v1741
        %v1838 = vunpack.c.l.b16 %v1742
        %v1839 = vunpack.c.l.b16 %v1743
        %v1840 = vunpack.c.l.b16 %v1744
        %v1841 = vunpack.c.l.b16 %v1745
        %v1842 = vunpack.c.l.b16 %v1746
        %v1843 = vunpack.c.l.b16 %v1747
        %v1844 = vunpack.c.l.b16 %v1748
        %v1845 = vunpack.c.l.b16 %v1749
        %v1846 = vunpack.c.l.b16 %v1750
        %v1847 = vunpack.c.l.b16 %v1751
        %v1848 = vunpack.c.l.b16 %v1752
        %v1849 = vunpack.c.l.b16 %v1753
        %v1850 = vunpack.c.l.b16 %v1754
        %v1851 = vunpack.c.l.b16 %v1755
        %v1852 = vunpack.c.l.b16 %v1756
        %v1853 = vunpack.c.l.b16 %v1757
        %v1854 = vunpack.c.l.b16 %v1758
        %v1855 = vunpack.c.l.b16 %v1759
        %v1856 = vunpack.c.l.b16 %v1760
        %v1857 = vunpack.c.l.b16 %v1761
        %v1858 = vpack.c.b16 %v1811, %v1810
        %v1859 = vpack.c.b16 %v1813, %v1812
        %v1860 = vpack.c.b16 %v1815, %v1814
        %v1861 = vpack.c.b16 %v1817, %v1816
        %v1862 = vpack.c.b16 %v1819, %v1818
        %v1863 = vpack.c.b16 %v1821, %v1820
        %v1864 = vpack.c.b16 %v1823, %v1822
        %v1865 = vpack.c.b16 %v1825, %v1824
        %v1866 = vpack.c.b16 %v1827, %v1826
        %v1867 = vpack.c.b16 %v1829, %v1828
        %v1868 = vpack.c.b16 %v1831, %v1830
        %v1869 = vpack.c.b16 %v1833, %v1832
        %v1870 = vpack.c.b16 %v1835, %v1834
        %v1871 = vpack.c.b16 %v1837, %v1836
        %v1872 = vpack.c.b16 %v1839, %v1838
        %v1873 = vpack.c.b16 %v1841, %v1840
        %v1874 = vpack.c.b16 %v1843, %v1842
        %v1875 = vpack.c.b16 %v1845, %v1844
        %v1876 = vpack.c.b16 %v1847, %v1846
        %v1877 = vpack.c.b16 %v1849, %v1848
        %v1878 = vpack.c.b16 %v1851, %v1850
        %v1879 = vpack.c.b16 %v1853, %v1852
        %v1880 = vpack.c.b16 %v1855, %v1854
        %v1881 = vpack.c.b16 %v1857, %v1856
        %1906 = vmatpush.bf16.msra.mxu0 %v1865
        %1907 = vmatpush.bf16.msra.mxu0 %v1864
        %1908 = vmatpush.bf16.msra.mxu0 %v1863
        %1909 = vmatpush.bf16.msra.mxu0 %v1862
        %1910 = vmatpush.bf16.msra.mxu0 %v1861
        %1911 = vmatpush.bf16.msra.mxu0 %v1860
        %1912 = vmatpush.bf16.msra.mxu0 %v1859
        %1913 = vmatpush.bf16.msra.mxu0 %v1858
        %1914 = vmatmul.bf16.gmra.mxu0 %v973
        %v1915 = vpop.f32.mrf.mxu0
        %v1916 = vadd.f32 0.0, %v1915
        %v1917 = vpop.f32.mrf.mxu0
        %v1918 = vadd.f32 0.0, %v1917
        %1919 = vmatmul.bf16.gmra.mxu0 %v974
        %v1920 = vpop.f32.mrf.mxu0
        %v1921 = vadd.f32 0.0, %v1920
        %v1922 = vpop.f32.mrf.mxu0
        %v1923 = vadd.f32 0.0, %v1922
        %1924 = vmatmul.bf16.gmra.mxu0 %v975
        %v1925 = vpop.f32.mrf.mxu0
        %v1926 = vadd.f32 0.0, %v1925
        %v1927 = vpop.f32.mrf.mxu0
        %v1928 = vadd.f32 0.0, %v1927
        %1929 = vmatmul.bf16.gmra.mxu0 %v976
        %v1930 = vpop.f32.mrf.mxu0
        %v1931 = vadd.f32 0.0, %v1930
        %v1932 = vpop.f32.mrf.mxu0
        %v1933 = vadd.f32 0.0, %v1932
        %1934 = vmatmul.bf16.gmra.mxu0 %v977
        %v1935 = vpop.f32.mrf.mxu0
        %v1936 = vadd.f32 0.0, %v1935
        %v1937 = vpop.f32.mrf.mxu0
        %v1938 = vadd.f32 0.0, %v1937
        %1939 = vmatmul.bf16.gmra.mxu0 %v978
        %v1940 = vpop.f32.mrf.mxu0
        %v1941 = vadd.f32 0.0, %v1940
        %v1942 = vpop.f32.mrf.mxu0
        %v1943 = vadd.f32 0.0, %v1942
        %1944 = vmatmul.bf16.gmra.mxu0 %v979
        %v1945 = vpop.f32.mrf.mxu0
        %v1946 = vadd.f32 0.0, %v1945
        %v1947 = vpop.f32.mrf.mxu0
        %v1948 = vadd.f32 0.0, %v1947
        %1949 = vmatmul.bf16.gmra.mxu0 %v980
        %v1950 = vpop.f32.mrf.mxu0
        %v1951 = vadd.f32 0.0, %v1950
        %v1952 = vpop.f32.mrf.mxu0
        %v1953 = vadd.f32 0.0, %v1952
        %1954 = vdwg.mxu0
        %1955 = vmatpush.bf16.msra.mxu0 %v1873
        %1956 = vmatpush.bf16.msra.mxu0 %v1872
        %1957 = vmatpush.bf16.msra.mxu0 %v1871
        %1958 = vmatpush.bf16.msra.mxu0 %v1870
        %1959 = vmatpush.bf16.msra.mxu0 %v1869
        %1960 = vmatpush.bf16.msra.mxu0 %v1868
        %1961 = vmatpush.bf16.msra.mxu0 %v1867
        %1962 = vmatpush.bf16.msra.mxu0 %v1866
        %1963 = vmatmul.bf16.gmra.mxu0 %v880
        %v1964 = vpop.f32.mrf.mxu0
        %v1965 = vadd.f32 %v1916, %v1964
        %v1966 = vpop.f32.mrf.mxu0
        %v1967 = vadd.f32 %v1918, %v1966
        %1968 = vmatmul.bf16.gmra.mxu0 %v881
        %v1969 = vpop.f32.mrf.mxu0
        %v1970 = vadd.f32 %v1921, %v1969
        %v1971 = vpop.f32.mrf.mxu0
        %v1972 = vadd.f32 %v1923, %v1971
        %1973 = vmatmul.bf16.gmra.mxu0 %v882
        %v1974 = vpop.f32.mrf.mxu0
        %v1975 = vadd.f32 %v1926, %v1974
        %v1976 = vpop.f32.mrf.mxu0
        %v1977 = vadd.f32 %v1928, %v1976
        %1978 = vmatmul.bf16.gmra.mxu0 %v883
        %v1979 = vpop.f32.mrf.mxu0
        %v1980 = vadd.f32 %v1931, %v1979
        %v1981 = vpop.f32.mrf.mxu0
        %v1982 = vadd.f32 %v1933, %v1981
        %1983 = vmatmul.bf16.gmra.mxu0 %v884
        %v1984 = vpop.f32.mrf.mxu0
        %v1985 = vadd.f32 %v1936, %v1984
        %v1986 = vpop.f32.mrf.mxu0
        %v1987 = vadd.f32 %v1938, %v1986
        %1988 = vmatmul.bf16.gmra.mxu0 %v885
        %v1989 = vpop.f32.mrf.mxu0
        %v1990 = vadd.f32 %v1941, %v1989
        %v1991 = vpop.f32.mrf.mxu0
        %v1992 = vadd.f32 %v1943, %v1991
        %1993 = vmatmul.bf16.gmra.mxu0 %v886
        %v1994 = vpop.f32.mrf.mxu0
        %v1995 = vadd.f32 %v1946, %v1994
        %v1996 = vpop.f32.mrf.mxu0
        %v1997 = vadd.f32 %v1948, %v1996
        %1998 = vmatmul.bf16.gmra.mxu0 %v887
        %v1999 = vpop.f32.mrf.mxu0
        %v2000 = vadd.f32 %v1951, %v1999
        %v2001 = vpop.f32.mrf.mxu0
        %v2002 = vadd.f32 %v1953, %v2001
        %2003 = vdwg.mxu0
        %2004 = vmatpush.bf16.msra.mxu0 %v1881
        %2005 = vmatpush.bf16.msra.mxu0 %v1880
        %2006 = vmatpush.bf16.msra.mxu0 %v1879
        %2007 = vmatpush.bf16.msra.mxu0 %v1878
        %2008 = vmatpush.bf16.msra.mxu0 %v1877
        %2009 = vmatpush.bf16.msra.mxu0 %v1876
        %2010 = vmatpush.bf16.msra.mxu0 %v1875
        %2011 = vmatpush.bf16.msra.mxu0 %v1874
        %2012 = vmatmul.bf16.gmra.mxu0 %v1016
        %v2013 = vpop.f32.mrf.mxu0
        %v2014 = vadd.f32 %v1965, %v2013
        %v2015 = vpop.f32.mrf.mxu0
        %v2016 = vadd.f32 %v1967, %v2015
        %2017 = vmatmul.bf16.gmra.mxu0 %v1017
        %v2018 = vpop.f32.mrf.mxu0
        %v2019 = vadd.f32 %v1970, %v2018
        %v2020 = vpop.f32.mrf.mxu0
        %v2021 = vadd.f32 %v1972, %v2020
        %2022 = vmatmul.bf16.gmra.mxu0 %v1018
        %v2023 = vpop.f32.mrf.mxu0
        %v2024 = vadd.f32 %v1975, %v2023
        %v2025 = vpop.f32.mrf.mxu0
        %v2026 = vadd.f32 %v1977, %v2025
        %2027 = vmatmul.bf16.gmra.mxu0 %v1019
        %v2028 = vpop.f32.mrf.mxu0
        %v2029 = vadd.f32 %v1980, %v2028
        %v2030 = vpop.f32.mrf.mxu0
        %v2031 = vadd.f32 %v1982, %v2030
        %2032 = vmatmul.bf16.gmra.mxu0 %v1020
        %v2033 = vpop.f32.mrf.mxu0
        %v2034 = vadd.f32 %v1985, %v2033
        %v2035 = vpop.f32.mrf.mxu0
        %v2036 = vadd.f32 %v1987, %v2035
        %2037 = vmatmul.bf16.gmra.mxu0 %v1021
        %v2038 = vpop.f32.mrf.mxu0
        %v2039 = vadd.f32 %v1990, %v2038
        %v2040 = vpop.f32.mrf.mxu0
        %v2041 = vadd.f32 %v1992, %v2040
        %2042 = vmatmul.bf16.gmra.mxu0 %v1022
        %v2043 = vpop.f32.mrf.mxu0
        %v2044 = vadd.f32 %v1995, %v2043
        %v2045 = vpop.f32.mrf.mxu0
        %v2046 = vadd.f32 %v1997, %v2045
        %2047 = vmatmul.bf16.gmra.mxu0 %v1023
        %v2048 = vpop.f32.mrf.mxu0
        %v2049 = vadd.f32 %v2000, %v2048
        %v2050 = vpop.f32.mrf.mxu0
        %v2051 = vadd.f32 %v2002, %v2050
        %2052 = vdwg.mxu0
        %v2053 = vadd.f32 %v1674, %v2014
        %v2054 = vadd.f32 %v1676, %v2016
        %v2055 = vadd.f32 %v1679, %v2019
        %v2056 = vadd.f32 %v1681, %v2021
        %v2057 = vadd.f32 %v1684, %v2024
        %v2058 = vadd.f32 %v1686, %v2026
        %v2059 = vadd.f32 %v1689, %v2029
        %v2060 = vadd.f32 %v1691, %v2031
        %v2061 = vadd.f32 %v1694, %v2034
        %v2062 = vadd.f32 %v1696, %v2036
        %v2063 = vadd.f32 %v1699, %v2039
        %v2064 = vadd.f32 %v1701, %v2041
        %v2065 = vadd.f32 %v1704, %v2044
        %v2066 = vadd.f32 %v1706, %v2046
        %v2067 = vadd.f32 %v1709, %v2049
        %v2068 = vadd.f32 %v1711, %v2051
        %v2069 = vld [vmem:[%s5] sm:$0x1]
        %v2071 = vperm.slane %v2069, 0
        %v2073 = vmul.f32 %v2053, %v2071
        %v2074 = vmul.f32 %v2054, %v2071
        %v2075 = vmul.f32 %v2055, %v2071
        %v2076 = vmul.f32 %v2056, %v2071
        %v2077 = vmul.f32 %v2057, %v2071
        %v2078 = vmul.f32 %v2058, %v2071
        %v2079 = vmul.f32 %v2059, %v2071
        %v2080 = vmul.f32 %v2060, %v2071
        %v2081 = vmul.f32 %v2061, %v2071
        %v2082 = vmul.f32 %v2062, %v2071
        %v2083 = vmul.f32 %v2063, %v2071
        %v2084 = vmul.f32 %v2064, %v2071
        %v2085 = vmul.f32 %v2065, %v2071
        %v2086 = vmul.f32 %v2066, %v2071
        %v2087 = vmul.f32 %v2067, %v2071
        %v2088 = vmul.f32 %v2068, %v2071
        %v2089 = vld [vmem:[%s6] sm:$0x1]
        %v2091 = vperm.slane %v2089, 0
        %v2093 = vadd.f32 %v2073, %v2091
        %v2094 = vadd.f32 %v2074, %v2091
        %v2095 = vadd.f32 %v2075, %v2091
        %v2096 = vadd.f32 %v2076, %v2091
        %v2097 = vadd.f32 %v2077, %v2091
        %v2098 = vadd.f32 %v2078, %v2091
        %v2099 = vadd.f32 %v2079, %v2091
        %v2100 = vadd.f32 %v2080, %v2091
        %v2101 = vadd.f32 %v2081, %v2091
        %v2102 = vadd.f32 %v2082, %v2091
        %v2103 = vadd.f32 %v2083, %v2091
        %v2104 = vadd.f32 %v2084, %v2091
        %v2105 = vadd.f32 %v2085, %v2091
        %v2106 = vadd.f32 %v2086, %v2091
        %v2107 = vadd.f32 %v2087, %v2091
        %v2108 = vadd.f32 %v2088, %v2091
        %vm2109 = vcmp.gt.f32.partialorder %v2093, 0.0
        %vm2110 = vcmp.gt.f32.partialorder %v2094, 0.0
        %vm2111 = vcmp.gt.f32.partialorder %v2095, 0.0
        %vm2112 = vcmp.gt.f32.partialorder %v2096, 0.0
        %vm2113 = vcmp.gt.f32.partialorder %v2097, 0.0
        %vm2114 = vcmp.gt.f32.partialorder %v2098, 0.0
        %vm2115 = vcmp.gt.f32.partialorder %v2099, 0.0
        %vm2116 = vcmp.gt.f32.partialorder %v2100, 0.0
        %vm2117 = vcmp.gt.f32.partialorder %v2101, 0.0
        %vm2118 = vcmp.gt.f32.partialorder %v2102, 0.0
        %vm2119 = vcmp.gt.f32.partialorder %v2103, 0.0
        %vm2120 = vcmp.gt.f32.partialorder %v2104, 0.0
        %vm2121 = vcmp.gt.f32.partialorder %v2105, 0.0
        %vm2122 = vcmp.gt.f32.partialorder %v2106, 0.0
        %vm2123 = vcmp.gt.f32.partialorder %v2107, 0.0
        %vm2124 = vcmp.gt.f32.partialorder %v2108, 0.0
        %v2125 = vmul.f32 %v2093, 0.1
        %v2126 = vmul.f32 %v2094, 0.1
        %v2127 = vmul.f32 %v2095, 0.1
        %v2128 = vmul.f32 %v2096, 0.1
        %v2129 = vmul.f32 %v2097, 0.1
        %v2130 = vmul.f32 %v2098, 0.1
        %v2131 = vmul.f32 %v2099, 0.1
        %v2132 = vmul.f32 %v2100, 0.1
        %v2133 = vmul.f32 %v2101, 0.1
        %v2134 = vmul.f32 %v2102, 0.1
        %v2135 = vmul.f32 %v2103, 0.1
        %v2136 = vmul.f32 %v2104, 0.1
        %v2137 = vmul.f32 %v2105, 0.1
        %v2138 = vmul.f32 %v2106, 0.1
        %v2139 = vmul.f32 %v2107, 0.1
        %v2140 = vmul.f32 %v2108, 0.1
        %v2141 = vsel %vm2109, %v2093, %v2125
        %v2142 = vsel %vm2110, %v2094, %v2126
        %v2143 = vsel %vm2111, %v2095, %v2127
        %v2144 = vsel %vm2112, %v2096, %v2128
        %v2145 = vsel %vm2113, %v2097, %v2129
        %v2146 = vsel %vm2114, %v2098, %v2130
        %v2147 = vsel %vm2115, %v2099, %v2131
        %v2148 = vsel %vm2116, %v2100, %v2132
        %v2149 = vsel %vm2117, %v2101, %v2133
        %v2150 = vsel %vm2118, %v2102, %v2134
        %v2151 = vsel %vm2119, %v2103, %v2135
        %v2152 = vsel %vm2120, %v2104, %v2136
        %v2153 = vsel %vm2121, %v2105, %v2137
        %v2154 = vsel %vm2122, %v2106, %v2138
        %v2155 = vsel %vm2123, %v2107, %v2139
        %v2156 = vsel %vm2124, %v2108, %v2140
        %v2157 = vadd.f32 %v479, %v2141
        %v2158 = vadd.f32 %v480, %v2142
        %v2159 = vadd.f32 %v481, %v2143
        %v2160 = vadd.f32 %v482, %v2144
        %v2161 = vadd.f32 %v483, %v2145
        %v2162 = vadd.f32 %v484, %v2146
        %v2163 = vadd.f32 %v485, %v2147
        %v2164 = vadd.f32 %v486, %v2148
        %v2165 = vadd.f32 %v487, %v2149
        %v2166 = vadd.f32 %v488, %v2150
        %v2167 = vadd.f32 %v489, %v2151
        %v2168 = vadd.f32 %v490, %v2152
        %v2169 = vadd.f32 %v491, %v2153
        %v2170 = vadd.f32 %v492, %v2154
        %v2171 = vadd.f32 %v493, %v2155
        %v2172 = vadd.f32 %v494, %v2156
        %2173 = vst [vmem:[%s278] sm:$0xff] %v2157
        %2174 = vst [vmem:[%s278 + $0x8] sm:$0xff] %v2158
        %2175 = vst [vmem:[%s278 + $0x10] sm:$0xff] %v2159
        %2176 = vst [vmem:[%s278 + $0x18] sm:$0xff] %v2160
        %2177 = vst [vmem:[%s278 + $0x20] sm:$0xff] %v2161
        %2178 = vst [vmem:[%s278 + $0x28] sm:$0xff] %v2162
        %2179 = vst [vmem:[%s278 + $0x30] sm:$0xff] %v2163
        %2180 = vst [vmem:[%s278 + $0x38] sm:$0xff] %v2164
        %2181 = vst [vmem:[%s278 + $0x40] sm:$0xff] %v2165
        %2182 = vst [vmem:[%s278 + $0x48] sm:$0xff] %v2166
        %2183 = vst [vmem:[%s278 + $0x50] sm:$0xff] %v2167
        %2184 = vst [vmem:[%s278 + $0x58] sm:$0xff] %v2168
        %2185 = vst [vmem:[%s278 + $0x60] sm:$0xff] %v2169
        %2186 = vst [vmem:[%s278 + $0x68] sm:$0xff] %v2170
        %2187 = vst [vmem:[%s278 + $0x70] sm:$0xff] %v2171
        %2188 = vst [vmem:[%s278 + $0x78] sm:$0xff] %v2172
        %s2189 = sand.u32 %s171, 1
        %s2190 = scalar_lea.sflag [#allocation6], %s2189
        %s2191 = sand.u32 %s171, 1
        %s2192 = smul.addr %s2191, 128
        %s2193 = scalar_lea.vmem [#allocation9], %s2192
        // Predicated region
        $region109: #{tpu_custom_call.1} parent=43 // pred_check
          %p2194 = pneg %p181
        $region110: #{tpu_custom_call.1} parent=43 // pred_check_branch
          %2196 = sbr.rel (%p2194) target = $region112
        $region111: #{tpu_custom_call.1} parent=43 // pred_region
          %s2197 = smul.u32 8, %s28
          %2199 = vsyncadd %s2190, 0
          %s2200 = smul.addr %s2197, 2
          %s2201 = smul.addr %s27, 32
          %s2202 = sadd.s32 %s2200, %s2201
          %s2203 = smul.addr %s2202, 8
          %s2204 = scalar_lea.hbm %s7, %s2203
          %s2205 = sshll.u32 %s2193, 4
          %s2206 = int_to_ptr.vmem [resolvable:$true] %s2205
          %s2207 = sshll.u32 %s2204, 4
          %s2208 = int_to_ptr.hbm [resolvable:$true] %s2207
          %2213 = dma.vmem_to_hbm [thread:$0]  %s2206, 2048, %s2208, %s2190, 128, 128, 8
        $region112: #{tpu_custom_call.1} parent=43 // pred_fallthru
          _
      $region44: #{tpu_custom_call.1} parent=5 // pred_fallthru
        _
      %p2214 = scmp.le.s32.totalorder 2, %s18
      // Predicated region
      $region113: #{tpu_custom_call.1} parent=5 // pred_check
        %p2215 = pneg %p2214
      $region114: #{tpu_custom_call.1} parent=5 // pred_check_branch
        %2217 = sbr.rel (%p2215) target = $region116
      $region115: #{tpu_custom_call.1} parent=5 // pred_region
        %s2218 = ssub.s32 %s18, 2
        // Predicated region
        $region117: #{tpu_custom_call.1} parent=115 // pred_check
          %p2219 = pneg %p187
        $region118: #{tpu_custom_call.1} parent=115 // pred_check_branch
          %2221 = sbr.rel (%p2219) target = $region120
        $region119: #{tpu_custom_call.1} parent=115 // pred_region
          %s2222 = sand.u32 %s172, 1
          %s2223 = scalar_lea.sflag [#allocation6], %s2222
          %s2224 = sand.u32 %s172, 1
          %s2225 = smul.addr %s2224, 128
          %s2226 = scalar_lea.vmem [#allocation9], %s2225
          %2228 = dma.done %s2223, 2048
        $region120: #{tpu_custom_call.1} parent=115 // pred_fallthru
          _
      $region116: #{tpu_custom_call.1} parent=5 // pred_fallthru
        _
    $region6: #{tpu_custom_call.1} parent=1 // loop_footer
      %s22 = sadd.s32 1, %s18
    $region7: #{tpu_custom_call.1} parent=1 // loop_footer_branch
      %17 = sbr.rel target = $region3
    $region8: #{tpu_custom_call.1} parent=1 // loop_exit
      _
    %2229 = vsyncpa [#allocation5], 1
    %s2230 = scalar_lea.sflag [#allocation5], 1
    %2231 = vsyncpa %s2230, 1
    %2232 = vsyncpa [#allocation8], 1
    %2233 = vsyncpa [#allocation6], 1
    %s2234 = scalar_lea.sflag [#allocation6], 1
    %2235 = vsyncpa %s2234, 1
  %2236 = vsyncmov [#allocation3]
  %s2237 = vpop.sfrf %2236
  %p2238 = scmp.eq.s32.totalorder %s2237, 0
  %p2239 = pneg %p2238
  %2241 = shalt.err (%p2239)
  %s2242 = scalar_lea.sflag [#allocation3], 1
  %2243 = vsyncmov %s2242
  %s2244 = vpop.sfrf %2243
  %p2245 = scmp.eq.s32.totalorder %s2244, 0
  %p2246 = pneg %p2245
  %2248 = shalt.err (%p2246)
  %s2249 = scalar_lea.sflag [#allocation3], 2
  %2250 = vsyncmov %s2249
  %s2251 = vpop.sfrf %2250
  %p2252 = scmp.eq.s32.totalorder %s2251, 0
  %p2253 = pneg %p2252
  %2255 = shalt.err (%p2253)
  %s2256 = scalar_lea.sflag [#allocation3], 3
  %2257 = vsyncmov %s2256
  %s2258 = vpop.sfrf %2257
  %p2259 = scmp.eq.s32.totalorder %s2258, 0
  %p2260 = pneg %p2259
  %2262 = shalt.err (%p2260)
  %s2263 = scalar_lea.sflag [#allocation3], 4
  %2264 = vsyncmov %s2263
  %s2265 = vpop.sfrf %2264
  %p2266 = scmp.eq.s32.totalorder %s2265, 0
  %p2267 = pneg %p2266
  %2269 = shalt.err (%p2267)
  %s2270 = scalar_lea.sflag [#allocation3], 5
  %2271 = vsyncmov %s2270
  %s2272 = vpop.sfrf %2271
  %p2273 = scmp.eq.s32.totalorder %s2272, 0
  %p2274 = pneg %p2273
  %2276 = shalt.err (%p2274)

</llo_original>
